<compile_context>
chip_gen: v7x
topology: tpu7x:2x2x1
jax: 0.10.0
libtpu: 0.0.40
codegen_flags: <defaults>
</compile_context>

<pallas_src>
import math

import jax
import jax.numpy as jnp
from jax.experimental import pallas as pl
from jax.experimental.pallas import tpu as pltpu


def _round_up(x: int, m: int) -> int:
    return (x + m - 1) // m * m


def _mlp_tau_kernel(tt_ref, m_ref, w1_ref, b1_ref, w2_ref, em_ref, o_ref):
    # tt_ref : (TN, K)       time values for TN rows, all K event types
    # m_ref  : (TN, K)       non-pad mask
    # w1_ref : (K, K*H)      block-diagonal first layer weight
    # b1_ref : (1, K*H)      tiled first layer bias
    # w2_ref : (K*H, K*E)    block-diagonal second layer weight * k_map
    # em_ref : (K, K*E)      0/1 expansion of per-type mask across E lanes
    # o_ref  : (TN, K*E)     lane-dense output slab
    tt = tt_ref[...]
    m = m_ref[...]

    # layer 1 (block diagonal): z[n, k*H + h] = tt[n, k] * W1[h] + b1[h]
    z = jnp.dot(tt, w1_ref[...],
                preferred_element_type=jnp.float32,
                precision=jax.lax.Precision.HIGHEST) + b1_ref[...]
    h = jnp.tanh(z)                                             # EUP

    # layer 2 (block diagonal, k_map folded in):
    #   enc[n, k*E + e] = sum_h tanh(z)[n, k*H+h] * W2[e, h] * k_map[k, e]
    enc = jnp.dot(h, w2_ref[...],
                  preferred_element_type=jnp.float32,
                  precision=jax.lax.Precision.HIGHEST)

    # expand mask[n, k] across the E lanes of its block via a tiny 0/1 matmul
    mexp = jnp.dot(m, em_ref[...],
                   preferred_element_type=jnp.float32,
                   precision=jax.lax.Precision.HIGHEST)

    o_ref[...] = (enc * mexp).astype(o_ref.dtype)


def _build_folded_params(w1, b1, w2, k_map):
    """Fold FFNN weights + k_map into block-diagonal, lane-folded constants."""
    H = w1.shape[0]
    E = w2.shape[0]
    K = k_map.shape[2]

    w1v = w1.reshape(H).astype(jnp.float32)                     # (H,)
    b1v = b1.reshape(H).astype(jnp.float32)                     # (H,)
    w2t = jnp.transpose(w2).astype(jnp.float32)                 # (H, E)
    km = k_map.reshape(K, E).astype(jnp.float32)                # (K, E)

    eyeK = jnp.eye(K, dtype=jnp.float32)

    # W1_big[k, k'*H + h] = (k == k') * W1[h]
    W1_big = (eyeK[:, :, None] * w1v[None, None, :]).reshape(K, K * H)
    # b1_big[0, k*H + h] = b1[h]
    b1_big = jnp.tile(b1v, K).reshape(1, K * H)
    # W2_big[k*H + h, k'*E + e] = (k == k') * W2[e, h] * k_map[k, e]
    blocks = w2t[None, :, :] * km[:, None, :]                   # (K, H, E)
    W2_big = (eyeK[:, None, :, None] * blocks[:, :, None, :]).reshape(K * H, K * E)
    # Em[k, k'*E + e] = (k == k')
    Em = jnp.repeat(eyeK, E, axis=1)                            # (K, K*E)

    return W1_big, b1_big, W2_big, Em


def mlp_tau_encoder(tt, non_pad_mask, w1, b1, w2, k_map,
                    *, row_tile=None, out_dtype=jnp.float32):
    """tt: (B,L,K) or (B,L); non_pad_mask: (B,L,K); w1: (H,1); b1: (H,);
    w2: (E,H); k_map: (1,1,K,E)  ->  (B, L, K, E)."""
    B, L, K = non_pad_mask.shape
    H = w1.shape[0]
    E = w2.shape[0]
    assert k_map.shape == (1, 1, K, E)

    # tt with ndim == 2 is broadcast across event types (matches the PyTorch
    # 'b l -> b l 1 1' path followed by the k_map broadcast).
    if tt.ndim == 2:
        tt3 = jnp.broadcast_to(tt[:, :, None], (B, L, K))
    else:
        tt3 = tt

    N = B * L
    KE = K * E
    KH = K * H

    tt2 = tt3.reshape(N, K).astype(jnp.float32)
    m2 = non_pad_mask.reshape(N, K).astype(jnp.float32)

    W1_big, b1_big, W2_big, Em = _build_folded_params(w1, b1, w2, k_map)

    # Row tiling: multiple of 8 sublanes, ~1 MiB f32 output tile by default,
    # rows padded so the grid divides evenly (padded rows have mask == 0 and
    # are sliced off afterwards).
    if row_tile is None:
        row_tile = 2048
    row_tile = _round_up(max(8, min(row_tile, _round_up(N, 8))), 8)
    Npad = _round_up(N, row_tile)
    if Npad != N:
        pad = Npad - N
        tt2 = jnp.pad(tt2, ((0, pad), (0, 0)))
        m2 = jnp.pad(m2, ((0, pad), (0, 0)))

    grid = (Npad // row_tile,)

    out = pl.pallas_call(
        _mlp_tau_kernel,
        out_shape=jax.ShapeDtypeStruct((Npad, KE), out_dtype),
        grid_spec=pl.GridSpec(
            grid=grid,
            in_specs=[
                pl.BlockSpec((row_tile, K), lambda i: (i, 0)),   # tt
                pl.BlockSpec((row_tile, K), lambda i: (i, 0)),   # mask
                pl.BlockSpec((K, KH), lambda i: (0, 0)),         # W1_big
                pl.BlockSpec((1, KH), lambda i: (0, 0)),         # b1_big
                pl.BlockSpec((KH, KE), lambda i: (0, 0)),        # W2_big (k_map folded)
                pl.BlockSpec((K, KE), lambda i: (0, 0)),         # mask expansion
            ],
            out_specs=pl.BlockSpec((row_tile, KE), lambda i: (i, 0)),
        ),
        compiler_params=pltpu.CompilerParams(
            dimension_semantics=("parallel",),
        ),
    )(tt2, m2, W1_big, b1_big, W2_big, Em)

    return out[:N].reshape(B, L, K, E)


def reference(tt, non_pad_mask, w1, b1, w2, k_map):
    # Pure-JAX mirror of the PyTorch forward.
    if tt.ndim == 2:
        tt4 = tt[:, :, None, None].astype(jnp.float32)           # (B, L, 1, 1)
    else:
        tt4 = tt[..., None].astype(jnp.float32)                  # (B, L, K, 1)
    h = jnp.tanh(tt4 * w1.reshape(-1) + b1)                      # (..., H)
    enc = jnp.einsum('blkh,eh->blke', h, w2,
                     precision=jax.lax.Precision.HIGHEST)        # (..., E)
    enc = enc * k_map                                            # (B, L, K, E)
    return enc * non_pad_mask[..., None].astype(jnp.float32)


if __name__ == "__main__":
    # Small shapes consistent with the module: batch=2, seq len=8,
    # num event types=4, hid_dim=16, embed_time=32 (so K*E = 128 lanes).
    B, L, K = 2, 8, 4
    H, E = 16, 32

    key = jax.random.PRNGKey(0)
    kt, kt2, kmask, kw1, kb1, kw2, kkm = jax.random.split(key, 7)

    tt = jax.random.uniform(kt, (B, L, K), dtype=jnp.float32)
    non_pad_mask = (jax.random.uniform(kmask, (B, L, K)) > 0.3).astype(jnp.float32)

    # PyTorch nn.Linear default init: U(-1/sqrt(fan_in), +1/sqrt(fan_in)).
    w1 = jax.random.uniform(kw1, (H, 1), minval=-1.0, maxval=1.0, dtype=jnp.float32)
    b1 = jax.random.uniform(kb1, (H,), minval=-1.0, maxval=1.0, dtype=jnp.float32)
    w2_bound = 1.0 / math.sqrt(H)
    w2 = jax.random.uniform(kw2, (E, H), minval=-w2_bound, maxval=w2_bound,
                            dtype=jnp.float32)
    # k_map is initialised to ones in the module; use random values here so the
    # per-type scaling path is actually exercised.
    k_map = jax.random.normal(kkm, (1, 1, K, E), dtype=jnp.float32)

    # 3-D tt path: (B, L, K)
    out = mlp_tau_encoder(tt, non_pad_mask, w1, b1, w2, k_map)
    out = jax.block_until_ready(out)
    ref = reference(tt, non_pad_mask, w1, b1, w2, k_map)
    assert out.shape == (B, L, K, E)
    assert jnp.allclose(out, ref, rtol=1e-4, atol=1e-4), "3-D tt mismatch vs reference"

    # 2-D tt path: (B, L) broadcast across event types.
    tt2d = jax.random.uniform(kt2, (B, L), dtype=jnp.float32)
    out2 = jax.block_until_ready(
        mlp_tau_encoder(tt2d, non_pad_mask, w1, b1, w2, k_map))
    ref2 = reference(tt2d, non_pad_mask, w1, b1, w2, k_map)
    assert jnp.allclose(out2, ref2, rtol=1e-4, atol=1e-4), "2-D tt mismatch vs reference"

    print("KERNEL_OK")
</pallas_src>

<mosaic_0001>
module attributes {stable_mosaic.version = 11 : i64} {
  func.func @_mlp_tau_kernel(%arg0: i32, %arg1: memref<16x4xf32, #tpu.memory_space<vmem>>, %arg2: memref<16x4xf32, #tpu.memory_space<vmem>>, %arg3: memref<4x64xf32, #tpu.memory_space<vmem>>, %arg4: memref<1x64xf32, #tpu.memory_space<vmem>>, %arg5: memref<64x128xf32, #tpu.memory_space<vmem>>, %arg6: memref<4x128xf32, #tpu.memory_space<vmem>>, %arg7: memref<16x128xf32, #tpu.memory_space<vmem>>) attributes {dimension_semantics = [#tpu.dimension_semantics<parallel>], iteration_bounds = array<i64: 1>, scalar_prefetch = 0 : i64, scratch_operands = 0 : i64, tpu.core_type = #tpu.core_type<tc>, window_params = [{transform_indices = @transform_0, window_bounds = array<i64: 16, 4>}, {transform_indices = @transform_1, window_bounds = array<i64: 16, 4>}, {pipeline_mode = #tpu.pipeline_mode<synchronous>, transform_indices = @transform_2, window_bounds = array<i64: 4, 64>}, {pipeline_mode = #tpu.pipeline_mode<synchronous>, transform_indices = @transform_3, window_bounds = array<i64: 1, 64>}, {pipeline_mode = #tpu.pipeline_mode<synchronous>, transform_indices = @transform_4, window_bounds = array<i64: 64, 128>}, {pipeline_mode = #tpu.pipeline_mode<synchronous>, transform_indices = @transform_5, window_bounds = array<i64: 4, 128>}, {transform_indices = @transform_6, window_bounds = array<i64: 16, 128>}]} {
    %c0 = arith.constant 0 : index
    %c0_0 = arith.constant 0 : index
    %0 = vector.load %arg1[%c0, %c0_0] : memref<16x4xf32, #tpu.memory_space<vmem>>, vector<16x4xf32>
    %c0_1 = arith.constant 0 : index
    %c0_2 = arith.constant 0 : index
    %1 = vector.load %arg2[%c0_1, %c0_2] : memref<16x4xf32, #tpu.memory_space<vmem>>, vector<16x4xf32>
    %c0_3 = arith.constant 0 : index
    %c0_4 = arith.constant 0 : index
    %2 = vector.load %arg3[%c0_3, %c0_4] : memref<4x64xf32, #tpu.memory_space<vmem>>, vector<4x64xf32>
    %cst = arith.constant dense<0.000000e+00> : vector<16x64xf32>
    %3 = tpu.matmul %0, %2, %cst {dimension_numbers = #tpu.dot_dimension_numbers<[1], [0], [0], [1], [0, 0, 1, 1], [], []>, precision = #tpu.contract_precision<fp32>} : vector<16x4xf32>, vector<4x64xf32>, vector<16x64xf32> -> vector<16x64xf32>
    %c0_5 = arith.constant 0 : index
    %c0_6 = arith.constant 0 : index
    %4 = vector.load %arg4[%c0_5, %c0_6] : memref<1x64xf32, #tpu.memory_space<vmem>>, vector<1x64xf32>
    %5 = vector.broadcast %4 : vector<1x64xf32> to vector<16x64xf32>
    %6 = arith.addf %3, %5 : vector<16x64xf32>
    %7 = math.tanh %6 : vector<16x64xf32>
    %c0_7 = arith.constant 0 : index
    %c0_8 = arith.constant 0 : index
    %8 = vector.load %arg5[%c0_7, %c0_8] : memref<64x128xf32, #tpu.memory_space<vmem>>, vector<64x128xf32>
    %cst_9 = arith.constant dense<0.000000e+00> : vector<16x128xf32>
    %9 = tpu.matmul %7, %8, %cst_9 {dimension_numbers = #tpu.dot_dimension_numbers<[1], [0], [0], [1], [0, 0, 1, 1], [], []>, precision = #tpu.contract_precision<fp32>} : vector<16x64xf32>, vector<64x128xf32>, vector<16x128xf32> -> vector<16x128xf32>
    %c0_10 = arith.constant 0 : index
    %c0_11 = arith.constant 0 : index
    %10 = vector.load %arg6[%c0_10, %c0_11] : memref<4x128xf32, #tpu.memory_space<vmem>>, vector<4x128xf32>
    %cst_12 = arith.constant dense<0.000000e+00> : vector<16x128xf32>
    %11 = tpu.matmul %1, %10, %cst_12 {dimension_numbers = #tpu.dot_dimension_numbers<[1], [0], [0], [1], [0, 0, 1, 1], [], []>, precision = #tpu.contract_precision<fp32>} : vector<16x4xf32>, vector<4x128xf32>, vector<16x128xf32> -> vector<16x128xf32>
    %12 = arith.mulf %9, %11 : vector<16x128xf32>
    %c0_13 = arith.constant 0 : index
    %c0_14 = arith.constant 0 : index
    %13 = vector.load %arg7[%c0_13, %c0_14] : memref<16x128xf32, #tpu.memory_space<vmem>>, vector<16x128xf32>
    tpu.vector_store %arg7[%c0_13, %c0_14], %12 {strides = array<i32>} : memref<16x128xf32, #tpu.memory_space<vmem>>, vector<16x128xf32>,
    return
  }
  func.func @transform_0(%arg0: i32) -> (i32, i32) {
    %c0_i32 = arith.constant 0 : i32
    %c0_i32_0 = arith.constant 0 : i32
    return %arg0, %c0_i32 : i32, i32
  }
  func.func @transform_1(%arg0: i32) -> (i32, i32) {
    %c0_i32 = arith.constant 0 : i32
    %c0_i32_0 = arith.constant 0 : i32
    return %arg0, %c0_i32 : i32, i32
  }
  func.func @transform_2(%arg0: i32) -> (i32, i32) {
    %c0_i32 = arith.constant 0 : i32
    %c0_i32_0 = arith.constant 0 : i32
    %c0_i32_1 = arith.constant 0 : i32
    return %c0_i32, %c0_i32_0 : i32, i32
  }
  func.func @transform_3(%arg0: i32) -> (i32, i32) {
    %c0_i32 = arith.constant 0 : i32
    %c0_i32_0 = arith.constant 0 : i32
    %c0_i32_1 = arith.constant 0 : i32
    return %c0_i32, %c0_i32_0 : i32, i32
  }
  func.func @transform_4(%arg0: i32) -> (i32, i32) {
    %c0_i32 = arith.constant 0 : i32
    %c0_i32_0 = arith.constant 0 : i32
    %c0_i32_1 = arith.constant 0 : i32
    return %c0_i32, %c0_i32_0 : i32, i32
  }
  func.func @transform_5(%arg0: i32) -> (i32, i32) {
    %c0_i32 = arith.constant 0 : i32
    %c0_i32_0 = arith.constant 0 : i32
    %c0_i32_1 = arith.constant 0 : i32
    return %c0_i32, %c0_i32_0 : i32, i32
  }
  func.func @transform_6(%arg0: i32) -> (i32, i32) {
    %c0_i32 = arith.constant 0 : i32
    %c0_i32_0 = arith.constant 0 : i32
    return %arg0, %c0_i32 : i32, i32
  }
}

</mosaic_0001>

<llo_original>
// kernel: tpu_custom_call.1
$region0: #{tpu_custom_call.1}
  #allocation0 [shape = 'u32[]', space=smem, size = 0x4, offset = 0x4, fixed_abs, tag = 'smem constant byte address 0x4 - core index']
  #allocation1 [shape = 'u32[144,128]{1,0:T(1,128)}', space=vmem, size = 0x12000, scoped, tag = 'internal scratch']
  %s0 = inlined_call_operand.vmem [shape: f32[16,4], index: 0, kind: input, shape index: {}]
  %s1 = inlined_call_operand.vmem [shape: f32[16,4], index: 1, kind: input, shape index: {}]
  %s2 = inlined_call_operand.vmem [shape: f32[4,64], index: 2, kind: input, shape index: {}]
  %s3 = inlined_call_operand.vmem [shape: f32[1,64], index: 3, kind: input, shape index: {}]
  %s4 = inlined_call_operand.hbm [shape: f32[64,128], index: 4, kind: input, shape index: {}]
  %s5 = inlined_call_operand.vmem [shape: f32[4,128], index: 5, kind: input, shape index: {}]
  %s6 = inlined_call_operand.hbm [shape: f32[16,128], index: 6, kind: output, shape index: {}]
  %s7 = sld [smem:[#allocation0]]
  $region38: #{tpu_custom_call.1} parent=0
    _
  %s9 = ssub.s32 1, %s7
  %s10 = scalar_select 0, %s9, %s7
  $region1: #{tpu_custom_call.1} parent=0
    #allocation2 [shape = 'u8[32768]{0}', space=vmem, size = 0x8000, scoped, tag = 'input window, operand 4, single buffered']
    #allocation3 [shape = 's32[1]{0}', space=sflag, size = 0x4, scoped, tag = 'scoped memory for tpu_custom_call.1']
    #allocation4 [shape = 's32[1]{0}', space=sflag, size = 0x4, scoped, tag = 'scoped memory for tpu_custom_call.1']
    #allocation5 [shape = 'u8[8192]{0}', space=vmem, size = 0x2000, scoped, tag = 'output window, operand 0, single buffered']
    %11 = vsyncpa [#allocation3], 0
    %12 = vsyncpa [#allocation4], 0
    // Predicated region
    $region2: #{tpu_custom_call.1} parent=1 // pred_check
      _
    $region3: #{tpu_custom_call.1} parent=1 // pred_check_branch
      %14 = sbr.rel (0) target = $region5
    $region4: #{tpu_custom_call.1} parent=1 // pred_region
      _
    $region5: #{tpu_custom_call.1} parent=1 // pred_fallthru
      _
    // Predicated region
    $region6: #{tpu_custom_call.1} parent=1 // pred_check
      _
    $region7: #{tpu_custom_call.1} parent=1 // pred_check_branch
      %16 = sbr.rel (0) target = $region9
    $region8: #{tpu_custom_call.1} parent=1 // pred_region
      _
    $region9: #{tpu_custom_call.1} parent=1 // pred_fallthru
      _
    // Predicated region
    $region10: #{tpu_custom_call.1} parent=1 // pred_check
      _
    $region11: #{tpu_custom_call.1} parent=1 // pred_check_branch
      %18 = sbr.rel (0) target = $region13
    $region12: #{tpu_custom_call.1} parent=1 // pred_region
      _
    $region13: #{tpu_custom_call.1} parent=1 // pred_fallthru
      _
    // Predicated region
    $region14: #{tpu_custom_call.1} parent=1 // pred_check
      _
    $region15: #{tpu_custom_call.1} parent=1 // pred_check_branch
      %20 = sbr.rel (0) target = $region17
    $region16: #{tpu_custom_call.1} parent=1 // pred_region
      _
    $region17: #{tpu_custom_call.1} parent=1 // pred_fallthru
      _
    // Predicated region
    $region18: #{tpu_custom_call.1} parent=1 // pred_check
      _
    $region19: #{tpu_custom_call.1} parent=1 // pred_check_branch
      %22 = sbr.rel (0) target = $region21
    $region20: #{tpu_custom_call.1} parent=1 // pred_region
      %s24 = ssub.s32 1024, 1024
      %25 = vsyncadd [#allocation3], %s24
      %s26 = sshll.u32 [#allocation2], 4
      %s27 = int_to_ptr.vmem [resolvable:$true] %s26
      %32 = dma.hbm_to_vmem [thread:$0]  %s4, 1024, %s27, [#allocation3], 128, 128, 8
    $region21: #{tpu_custom_call.1} parent=1 // pred_fallthru
      _
    // Predicated region
    $region22: #{tpu_custom_call.1} parent=1 // pred_check
      _
    $region23: #{tpu_custom_call.1} parent=1 // pred_check_branch
      %34 = sbr.rel (0) target = $region25
    $region24: #{tpu_custom_call.1} parent=1 // pred_region
      _
    $region25: #{tpu_custom_call.1} parent=1 // pred_fallthru
      _
    // Predicated region
    $region26: #{tpu_custom_call.1} parent=1 // pred_check
      _
    $region27: #{tpu_custom_call.1} parent=1 // pred_check_branch
      %36 = sbr.rel (0) target = $region29
    $region28: #{tpu_custom_call.1} parent=1 // pred_region
      %37 = dma.done [#allocation3], 1024
    $region29: #{tpu_custom_call.1} parent=1 // pred_fallthru
      _
    %v38 = vld [vmem:[%s0] sm:$0xff]
    %v39 = vld [vmem:[%s0 + $0x8] sm:$0xff]
    %v40 = vld [vmem:[%s1] sm:$0xff]
    %v41 = vld [vmem:[%s1 + $0x8] sm:$0xff]
    %v42 = vld [vmem:[%s2] sm:$0xf]
    %v43 = vld [vmem:[%s3] sm:$0x1]
    %v45 = vlaneseq
    %v46 = vshrl.u32 %v45, 7
    %v47 = vsub.s32 0, %v46
    %v48 = vrot.slane %v43, %v47
    %vm50 = vcmask 31744
    %v52 = vsel %vm50, %v38, 0
    %v55 = vsel %vm50, %v39, 0
    %vm57 = vcmask 1043456
    %v59 = vsel %vm57, %v42, 0
    %61 = vmatprep.subr.mxu0 0.0
    %v62 = vand.u32 %v59, 4294901760
    %63 = vmatpush1.msra.mxu0 %v62
    %64 = vmatprep.subr.mxu0 0.0
    %65 = vmatpush1.msra.mxu0 0.0
    %66 = vmatprep.subr.mxu0 0.0
    %67 = vmatpush1.msra.mxu0 0.0
    %68 = vmatprep.subr.mxu0 0.0
    %69 = vmatpush1.msra.mxu0 0.0
    %70 = vmatprep.subr.mxu0 0.0
    %71 = vmatpush1.msra.mxu0 0.0
    %72 = vmatprep.subr.mxu0 0.0
    %73 = vmatpush1.msra.mxu0 0.0
    %74 = vmatprep.subr.mxu0 0.0
    %75 = vmatpush1.msra.mxu0 0.0
    %76 = vmatprep.subr.mxu0 0.0
    %77 = vmatpush1.msra.mxu0 0.0
    %78 = vmatprep.subr.mxu0 0.0
    %79 = vmatpush1.msra.mxu0 0.0
    %80 = vmatprep.subr.mxu0 0.0
    %81 = vmatpush1.msra.mxu0 0.0
    %82 = vmatprep.subr.mxu0 0.0
    %83 = vmatpush1.msra.mxu0 0.0
    %84 = vmatprep.subr.mxu0 0.0
    %85 = vmatpush1.msra.mxu0 0.0
    %86 = vmatprep.subr.mxu0 0.0
    %87 = vmatpush1.msra.mxu0 0.0
    %88 = vmatprep.subr.mxu0 0.0
    %89 = vmatpush1.msra.mxu0 0.0
    %90 = vmatprep.subr.mxu0 0.0
    %91 = vmatpush1.msra.mxu0 0.0
    %92 = vmatprep.subr.mxu0 0.0
    %93 = vmatpush1.msra.mxu0 0.0
    %94 = vmatprep.subr.mxu0 0.0
    %95 = vmatpush1.msra.mxu0 0.0
    %96 = vmatprep.subr.mxu0 0.0
    %97 = vmatpush1.msra.mxu0 0.0
    %98 = vmatprep.subr.mxu0 0.0
    %99 = vmatpush1.msra.mxu0 0.0
    %100 = vmatprep.subr.mxu0 0.0
    %101 = vmatpush1.msra.mxu0 0.0
    %102 = vmatprep.subr.mxu0 0.0
    %103 = vmatpush1.msra.mxu0 0.0
    %104 = vmatprep.subr.mxu0 0.0
    %105 = vmatpush1.msra.mxu0 0.0
    %106 = vmatprep.subr.mxu0 0.0
    %107 = vmatpush1.msra.mxu0 0.0
    %108 = vmatprep.subr.mxu0 0.0
    %109 = vmatpush1.msra.mxu0 0.0
    %110 = vmatprep.subr.mxu0 0.0
    %111 = vmatpush1.msra.mxu0 0.0
    %112 = vmatprep.subr.mxu0 0.0
    %113 = vmatpush1.msra.mxu0 0.0
    %114 = vmatprep.subr.mxu0 0.0
    %115 = vmatpush1.msra.mxu0 0.0
    %116 = vmatprep.subr.mxu0 0.0
    %117 = vmatpush1.msra.mxu0 0.0
    %118 = vmatprep.subr.mxu0 0.0
    %119 = vmatpush1.msra.mxu0 0.0
    %120 = vmatprep.subr.mxu0 0.0
    %121 = vmatpush1.msra.mxu0 0.0
    %122 = vmatprep.subr.mxu0 0.0
    %123 = vmatpush1.msra.mxu0 0.0
    %124 = vmatprep.subr.mxu0 0.0
    %125 = vmatpush1.msra.mxu0 0.0
    %126 = vmatprep.mubr.f32.mxu0 0.0
    %v127 = vand.u32 %v52, 4294901760
    %v128 = vsub.f32 %v52, %v127
    %v129 = vand.u32 %v128, 4294901760
    %v130 = vsub.f32 %v128, %v129
    %v131 = vand.u32 %v130, 4294901760
    %132 = vmatmul.mubr.f32.gmra.mrb[0].mxu0 %v131
    %v133 = vpop.f32.mrb[0].mxu0
    %v134 = vadd.f32 %v48, %v133
    %v135 = vpop.f32.mrb[0].mxu0
    %136 = vmatprep.mubr.f32.mxu0 0.0
    %v137 = vand.u32 %v55, 4294901760
    %v138 = vsub.f32 %v55, %v137
    %v139 = vand.u32 %v138, 4294901760
    %v140 = vsub.f32 %v138, %v139
    %v141 = vand.u32 %v140, 4294901760
    %142 = vmatmul.mubr.f32.gmra.mrb[0].mxu0 %v141
    %v143 = vpop.f32.mrb[0].mxu0
    %v144 = vadd.f32 %v48, %v143
    %v145 = vpop.f32.mrb[0].mxu0
    %146 = vdwg.mxu0
    %147 = vmatprep.subr.mxu0 0.0
    %v148 = vand.u32 %v59, 4294901760
    %v149 = vsub.f32 %v59, %v148
    %v150 = vand.u32 %v149, 4294901760
    %v151 = vsub.f32 %v149, %v150
    %v152 = vand.u32 %v151, 4294901760
    %153 = vmatpush1.msra.mxu0 %v152
    %154 = vmatprep.subr.mxu0 0.0
    %155 = vmatpush1.msra.mxu0 0.0
    %156 = vmatprep.subr.mxu0 0.0
    %157 = vmatpush1.msra.mxu0 0.0
    %158 = vmatprep.subr.mxu0 0.0
    %159 = vmatpush1.msra.mxu0 0.0
    %160 = vmatprep.subr.mxu0 0.0
    %161 = vmatpush1.msra.mxu0 0.0
    %162 = vmatprep.subr.mxu0 0.0
    %163 = vmatpush1.msra.mxu0 0.0
    %164 = vmatprep.subr.mxu0 0.0
    %165 = vmatpush1.msra.mxu0 0.0
    %166 = vmatprep.subr.mxu0 0.0
    %167 = vmatpush1.msra.mxu0 0.0
    %168 = vmatprep.subr.mxu0 0.0
    %169 = vmatpush1.msra.mxu0 0.0
    %170 = vmatprep.subr.mxu0 0.0
    %171 = vmatpush1.msra.mxu0 0.0
    %172 = vmatprep.subr.mxu0 0.0
    %173 = vmatpush1.msra.mxu0 0.0
    %174 = vmatprep.subr.mxu0 0.0
    %175 = vmatpush1.msra.mxu0 0.0
    %176 = vmatprep.subr.mxu0 0.0
    %177 = vmatpush1.msra.mxu0 0.0
    %178 = vmatprep.subr.mxu0 0.0
    %179 = vmatpush1.msra.mxu0 0.0
    %180 = vmatprep.subr.mxu0 0.0
    %181 = vmatpush1.msra.mxu0 0.0
    %182 = vmatprep.subr.mxu0 0.0
    %183 = vmatpush1.msra.mxu0 0.0
    %184 = vmatprep.subr.mxu0 0.0
    %185 = vmatpush1.msra.mxu0 0.0
    %186 = vmatprep.subr.mxu0 0.0
    %187 = vmatpush1.msra.mxu0 0.0
    %188 = vmatprep.subr.mxu0 0.0
    %189 = vmatpush1.msra.mxu0 0.0
    %190 = vmatprep.subr.mxu0 0.0
    %191 = vmatpush1.msra.mxu0 0.0
    %192 = vmatprep.subr.mxu0 0.0
    %193 = vmatpush1.msra.mxu0 0.0
    %194 = vmatprep.subr.mxu0 0.0
    %195 = vmatpush1.msra.mxu0 0.0
    %196 = vmatprep.subr.mxu0 0.0
    %197 = vmatpush1.msra.mxu0 0.0
    %198 = vmatprep.subr.mxu0 0.0
    %199 = vmatpush1.msra.mxu0 0.0
    %200 = vmatprep.subr.mxu0 0.0
    %201 = vmatpush1.msra.mxu0 0.0
    %202 = vmatprep.subr.mxu0 0.0
    %203 = vmatpush1.msra.mxu0 0.0
    %204 = vmatprep.subr.mxu0 0.0
    %205 = vmatpush1.msra.mxu0 0.0
    %206 = vmatprep.subr.mxu0 0.0
    %207 = vmatpush1.msra.mxu0 0.0
    %208 = vmatprep.subr.mxu0 0.0
    %209 = vmatpush1.msra.mxu0 0.0
    %210 = vmatprep.subr.mxu0 0.0
    %211 = vmatpush1.msra.mxu0 0.0
    %212 = vmatprep.subr.mxu0 0.0
    %213 = vmatpush1.msra.mxu0 0.0
    %214 = vmatprep.subr.mxu0 0.0
    %215 = vmatpush1.msra.mxu0 0.0
    %216 = vmatprep.mubr.f32.mxu0 0.0
    %v217 = vand.u32 %v52, 4294901760
    %218 = vmatmul.mubr.f32.gmra.mrb[0].mxu0 %v217
    %v219 = vpop.f32.mrb[0].mxu0
    %v220 = vadd.f32 %v134, %v219
    %v221 = vpop.f32.mrb[0].mxu0
    %222 = vmatprep.mubr.f32.mxu0 0.0
    %v223 = vand.u32 %v55, 4294901760
    %224 = vmatmul.mubr.f32.gmra.mrb[0].mxu0 %v223
    %v225 = vpop.f32.mrb[0].mxu0
    %v226 = vadd.f32 %v144, %v225
    %v227 = vpop.f32.mrb[0].mxu0
    %228 = vdwg.mxu0
    %229 = vmatprep.subr.mxu0 0.0
    %v230 = vand.u32 %v59, 4294901760
    %v231 = vsub.f32 %v59, %v230
    %232 = vmatpush1.msra.mxu0 %v231
    %233 = vmatprep.subr.mxu0 0.0
    %234 = vmatpush1.msra.mxu0 0.0
    %235 = vmatprep.subr.mxu0 0.0
    %236 = vmatpush1.msra.mxu0 0.0
    %237 = vmatprep.subr.mxu0 0.0
    %238 = vmatpush1.msra.mxu0 0.0
    %239 = vmatprep.subr.mxu0 0.0
    %240 = vmatpush1.msra.mxu0 0.0
    %241 = vmatprep.subr.mxu0 0.0
    %242 = vmatpush1.msra.mxu0 0.0
    %243 = vmatprep.subr.mxu0 0.0
    %244 = vmatpush1.msra.mxu0 0.0
    %245 = vmatprep.subr.mxu0 0.0
    %246 = vmatpush1.msra.mxu0 0.0
    %247 = vmatprep.subr.mxu0 0.0
    %248 = vmatpush1.msra.mxu0 0.0
    %249 = vmatprep.subr.mxu0 0.0
    %250 = vmatpush1.msra.mxu0 0.0
    %251 = vmatprep.subr.mxu0 0.0
    %252 = vmatpush1.msra.mxu0 0.0
    %253 = vmatprep.subr.mxu0 0.0
    %254 = vmatpush1.msra.mxu0 0.0
    %255 = vmatprep.subr.mxu0 0.0
    %256 = vmatpush1.msra.mxu0 0.0
    %257 = vmatprep.subr.mxu0 0.0
    %258 = vmatpush1.msra.mxu0 0.0
    %259 = vmatprep.subr.mxu0 0.0
    %260 = vmatpush1.msra.mxu0 0.0
    %261 = vmatprep.subr.mxu0 0.0
    %262 = vmatpush1.msra.mxu0 0.0
    %263 = vmatprep.subr.mxu0 0.0
    %264 = vmatpush1.msra.mxu0 0.0
    %265 = vmatprep.subr.mxu0 0.0
    %266 = vmatpush1.msra.mxu0 0.0
    %267 = vmatprep.subr.mxu0 0.0
    %268 = vmatpush1.msra.mxu0 0.0
    %269 = vmatprep.subr.mxu0 0.0
    %270 = vmatpush1.msra.mxu0 0.0
    %271 = vmatprep.subr.mxu0 0.0
    %272 = vmatpush1.msra.mxu0 0.0
    %273 = vmatprep.subr.mxu0 0.0
    %274 = vmatpush1.msra.mxu0 0.0
    %275 = vmatprep.subr.mxu0 0.0
    %276 = vmatpush1.msra.mxu0 0.0
    %277 = vmatprep.subr.mxu0 0.0
    %278 = vmatpush1.msra.mxu0 0.0
    %279 = vmatprep.subr.mxu0 0.0
    %280 = vmatpush1.msra.mxu0 0.0
    %281 = vmatprep.subr.mxu0 0.0
    %282 = vmatpush1.msra.mxu0 0.0
    %283 = vmatprep.subr.mxu0 0.0
    %284 = vmatpush1.msra.mxu0 0.0
    %285 = vmatprep.subr.mxu0 0.0
    %286 = vmatpush1.msra.mxu0 0.0
    %287 = vmatprep.subr.mxu0 0.0
    %288 = vmatpush1.msra.mxu0 0.0
    %289 = vmatprep.subr.mxu0 0.0
    %290 = vmatpush1.msra.mxu0 0.0
    %291 = vmatprep.subr.mxu0 0.0
    %292 = vmatpush1.msra.mxu0 0.0
    %293 = vmatprep.subr.mxu0 0.0
    %294 = vmatpush1.msra.mxu0 0.0
    %295 = vmatprep.mubr.f32.mxu0 0.0
    %v296 = vand.u32 %v52, 4294901760
    %v297 = vsub.f32 %v52, %v296
    %298 = vmatmul.mubr.f32.gmra.mrb[0].mxu0 %v297
    %v299 = vpop.f32.mrb[0].mxu0
    %v300 = vadd.f32 %v220, %v299
    %v301 = vpop.f32.mrb[0].mxu0
    %302 = vmatprep.mubr.f32.mxu0 0.0
    %v303 = vand.u32 %v55, 4294901760
    %v304 = vsub.f32 %v55, %v303
    %305 = vmatmul.mubr.f32.gmra.mrb[0].mxu0 %v304
    %v306 = vpop.f32.mrb[0].mxu0
    %v307 = vadd.f32 %v226, %v306
    %v308 = vpop.f32.mrb[0].mxu0
    %309 = vdwg.mxu0
    %310 = vmatprep.subr.mxu0 0.0
    %v311 = vand.u32 %v59, 4294901760
    %312 = vmatpush1.msra.mxu0 %v311
    %313 = vmatprep.subr.mxu0 0.0
    %314 = vmatpush1.msra.mxu0 0.0
    %315 = vmatprep.subr.mxu0 0.0
    %316 = vmatpush1.msra.mxu0 0.0
    %317 = vmatprep.subr.mxu0 0.0
    %318 = vmatpush1.msra.mxu0 0.0
    %319 = vmatprep.subr.mxu0 0.0
    %320 = vmatpush1.msra.mxu0 0.0
    %321 = vmatprep.subr.mxu0 0.0
    %322 = vmatpush1.msra.mxu0 0.0
    %323 = vmatprep.subr.mxu0 0.0
    %324 = vmatpush1.msra.mxu0 0.0
    %325 = vmatprep.subr.mxu0 0.0
    %326 = vmatpush1.msra.mxu0 0.0
    %327 = vmatprep.subr.mxu0 0.0
    %328 = vmatpush1.msra.mxu0 0.0
    %329 = vmatprep.subr.mxu0 0.0
    %330 = vmatpush1.msra.mxu0 0.0
    %331 = vmatprep.subr.mxu0 0.0
    %332 = vmatpush1.msra.mxu0 0.0
    %333 = vmatprep.subr.mxu0 0.0
    %334 = vmatpush1.msra.mxu0 0.0
    %335 = vmatprep.subr.mxu0 0.0
    %336 = vmatpush1.msra.mxu0 0.0
    %337 = vmatprep.subr.mxu0 0.0
    %338 = vmatpush1.msra.mxu0 0.0
    %339 = vmatprep.subr.mxu0 0.0
    %340 = vmatpush1.msra.mxu0 0.0
    %341 = vmatprep.subr.mxu0 0.0
    %342 = vmatpush1.msra.mxu0 0.0
    %343 = vmatprep.subr.mxu0 0.0
    %344 = vmatpush1.msra.mxu0 0.0
    %345 = vmatprep.subr.mxu0 0.0
    %346 = vmatpush1.msra.mxu0 0.0
    %347 = vmatprep.subr.mxu0 0.0
    %348 = vmatpush1.msra.mxu0 0.0
    %349 = vmatprep.subr.mxu0 0.0
    %350 = vmatpush1.msra.mxu0 0.0
    %351 = vmatprep.subr.mxu0 0.0
    %352 = vmatpush1.msra.mxu0 0.0
    %353 = vmatprep.subr.mxu0 0.0
    %354 = vmatpush1.msra.mxu0 0.0
    %355 = vmatprep.subr.mxu0 0.0
    %356 = vmatpush1.msra.mxu0 0.0
    %357 = vmatprep.subr.mxu0 0.0
    %358 = vmatpush1.msra.mxu0 0.0
    %359 = vmatprep.subr.mxu0 0.0
    %360 = vmatpush1.msra.mxu0 0.0
    %361 = vmatprep.subr.mxu0 0.0
    %362 = vmatpush1.msra.mxu0 0.0
    %363 = vmatprep.subr.mxu0 0.0
    %364 = vmatpush1.msra.mxu0 0.0
    %365 = vmatprep.subr.mxu0 0.0
    %366 = vmatpush1.msra.mxu0 0.0
    %367 = vmatprep.subr.mxu0 0.0
    %368 = vmatpush1.msra.mxu0 0.0
    %369 = vmatprep.subr.mxu0 0.0
    %370 = vmatpush1.msra.mxu0 0.0
    %371 = vmatprep.subr.mxu0 0.0
    %372 = vmatpush1.msra.mxu0 0.0
    %373 = vmatprep.subr.mxu0 0.0
    %374 = vmatpush1.msra.mxu0 0.0
    %375 = vmatprep.mubr.f32.mxu0 0.0
    %v376 = vand.u32 %v52, 4294901760
    %v377 = vsub.f32 %v52, %v376
    %v378 = vand.u32 %v377, 4294901760
    %379 = vmatmul.mubr.f32.gmra.mrb[0].mxu0 %v378
    %v380 = vpop.f32.mrb[0].mxu0
    %v381 = vadd.f32 %v300, %v380
    %v382 = vpop.f32.mrb[0].mxu0
    %383 = vmatprep.mubr.f32.mxu0 0.0
    %v384 = vand.u32 %v55, 4294901760
    %v385 = vsub.f32 %v55, %v384
    %v386 = vand.u32 %v385, 4294901760
    %387 = vmatmul.mubr.f32.gmra.mrb[0].mxu0 %v386
    %v388 = vpop.f32.mrb[0].mxu0
    %v389 = vadd.f32 %v307, %v388
    %v390 = vpop.f32.mrb[0].mxu0
    %391 = vdwg.mxu0
    %392 = vmatprep.subr.mxu0 0.0
    %v393 = vand.u32 %v59, 4294901760
    %v394 = vsub.f32 %v59, %v393
    %v395 = vand.u32 %v394, 4294901760
    %396 = vmatpush1.msra.mxu0 %v395
    %397 = vmatprep.subr.mxu0 0.0
    %398 = vmatpush1.msra.mxu0 0.0
    %399 = vmatprep.subr.mxu0 0.0
    %400 = vmatpush1.msra.mxu0 0.0
    %401 = vmatprep.subr.mxu0 0.0
    %402 = vmatpush1.msra.mxu0 0.0
    %403 = vmatprep.subr.mxu0 0.0
    %404 = vmatpush1.msra.mxu0 0.0
    %405 = vmatprep.subr.mxu0 0.0
    %406 = vmatpush1.msra.mxu0 0.0
    %407 = vmatprep.subr.mxu0 0.0
    %408 = vmatpush1.msra.mxu0 0.0
    %409 = vmatprep.subr.mxu0 0.0
    %410 = vmatpush1.msra.mxu0 0.0
    %411 = vmatprep.subr.mxu0 0.0
    %412 = vmatpush1.msra.mxu0 0.0
    %413 = vmatprep.subr.mxu0 0.0
    %414 = vmatpush1.msra.mxu0 0.0
    %415 = vmatprep.subr.mxu0 0.0
    %416 = vmatpush1.msra.mxu0 0.0
    %417 = vmatprep.subr.mxu0 0.0
    %418 = vmatpush1.msra.mxu0 0.0
    %419 = vmatprep.subr.mxu0 0.0
    %420 = vmatpush1.msra.mxu0 0.0
    %421 = vmatprep.subr.mxu0 0.0
    %422 = vmatpush1.msra.mxu0 0.0
    %423 = vmatprep.subr.mxu0 0.0
    %424 = vmatpush1.msra.mxu0 0.0
    %425 = vmatprep.subr.mxu0 0.0
    %426 = vmatpush1.msra.mxu0 0.0
    %427 = vmatprep.subr.mxu0 0.0
    %428 = vmatpush1.msra.mxu0 0.0
    %429 = vmatprep.subr.mxu0 0.0
    %430 = vmatpush1.msra.mxu0 0.0
    %431 = vmatprep.subr.mxu0 0.0
    %432 = vmatpush1.msra.mxu0 0.0
    %433 = vmatprep.subr.mxu0 0.0
    %434 = vmatpush1.msra.mxu0 0.0
    %435 = vmatprep.subr.mxu0 0.0
    %436 = vmatpush1.msra.mxu0 0.0
    %437 = vmatprep.subr.mxu0 0.0
    %438 = vmatpush1.msra.mxu0 0.0
    %439 = vmatprep.subr.mxu0 0.0
    %440 = vmatpush1.msra.mxu0 0.0
    %441 = vmatprep.subr.mxu0 0.0
    %442 = vmatpush1.msra.mxu0 0.0
    %443 = vmatprep.subr.mxu0 0.0
    %444 = vmatpush1.msra.mxu0 0.0
    %445 = vmatprep.subr.mxu0 0.0
    %446 = vmatpush1.msra.mxu0 0.0
    %447 = vmatprep.subr.mxu0 0.0
    %448 = vmatpush1.msra.mxu0 0.0
    %449 = vmatprep.subr.mxu0 0.0
    %450 = vmatpush1.msra.mxu0 0.0
    %451 = vmatprep.subr.mxu0 0.0
    %452 = vmatpush1.msra.mxu0 0.0
    %453 = vmatprep.subr.mxu0 0.0
    %454 = vmatpush1.msra.mxu0 0.0
    %455 = vmatprep.subr.mxu0 0.0
    %456 = vmatpush1.msra.mxu0 0.0
    %457 = vmatprep.subr.mxu0 0.0
    %458 = vmatpush1.msra.mxu0 0.0
    %459 = vmatprep.mubr.f32.mxu0 0.0
    %v460 = vand.u32 %v52, 4294901760
    %461 = vmatmul.mubr.f32.gmra.mrb[0].mxu0 %v460
    %v462 = vpop.f32.mrb[0].mxu0
    %v463 = vadd.f32 %v381, %v462
    %v464 = vpop.f32.mrb[0].mxu0
    %465 = vmatprep.mubr.f32.mxu0 0.0
    %v466 = vand.u32 %v55, 4294901760
    %467 = vmatmul.mubr.f32.gmra.mrb[0].mxu0 %v466
    %v468 = vpop.f32.mrb[0].mxu0
    %v469 = vadd.f32 %v389, %v468
    %v470 = vpop.f32.mrb[0].mxu0
    %471 = vdwg.mxu0
    %472 = vmatprep.subr.mxu0 0.0
    %v473 = vand.u32 %v59, 4294901760
    %474 = vmatpush1.msra.mxu0 %v473
    %475 = vmatprep.subr.mxu0 0.0
    %476 = vmatpush1.msra.mxu0 0.0
    %477 = vmatprep.subr.mxu0 0.0
    %478 = vmatpush1.msra.mxu0 0.0
    %479 = vmatprep.subr.mxu0 0.0
    %480 = vmatpush1.msra.mxu0 0.0
    %481 = vmatprep.subr.mxu0 0.0
    %482 = vmatpush1.msra.mxu0 0.0
    %483 = vmatprep.subr.mxu0 0.0
    %484 = vmatpush1.msra.mxu0 0.0
    %485 = vmatprep.subr.mxu0 0.0
    %486 = vmatpush1.msra.mxu0 0.0
    %487 = vmatprep.subr.mxu0 0.0
    %488 = vmatpush1.msra.mxu0 0.0
    %489 = vmatprep.subr.mxu0 0.0
    %490 = vmatpush1.msra.mxu0 0.0
    %491 = vmatprep.subr.mxu0 0.0
    %492 = vmatpush1.msra.mxu0 0.0
    %493 = vmatprep.subr.mxu0 0.0
    %494 = vmatpush1.msra.mxu0 0.0
    %495 = vmatprep.subr.mxu0 0.0
    %496 = vmatpush1.msra.mxu0 0.0
    %497 = vmatprep.subr.mxu0 0.0
    %498 = vmatpush1.msra.mxu0 0.0
    %499 = vmatprep.subr.mxu0 0.0
    %500 = vmatpush1.msra.mxu0 0.0
    %501 = vmatprep.subr.mxu0 0.0
    %502 = vmatpush1.msra.mxu0 0.0
    %503 = vmatprep.subr.mxu0 0.0
    %504 = vmatpush1.msra.mxu0 0.0
    %505 = vmatprep.subr.mxu0 0.0
    %506 = vmatpush1.msra.mxu0 0.0
    %507 = vmatprep.subr.mxu0 0.0
    %508 = vmatpush1.msra.mxu0 0.0
    %509 = vmatprep.subr.mxu0 0.0
    %510 = vmatpush1.msra.mxu0 0.0
    %511 = vmatprep.subr.mxu0 0.0
    %512 = vmatpush1.msra.mxu0 0.0
    %513 = vmatprep.subr.mxu0 0.0
    %514 = vmatpush1.msra.mxu0 0.0
    %515 = vmatprep.subr.mxu0 0.0
    %516 = vmatpush1.msra.mxu0 0.0
    %517 = vmatprep.subr.mxu0 0.0
    %518 = vmatpush1.msra.mxu0 0.0
    %519 = vmatprep.subr.mxu0 0.0
    %520 = vmatpush1.msra.mxu0 0.0
    %521 = vmatprep.subr.mxu0 0.0
    %522 = vmatpush1.msra.mxu0 0.0
    %523 = vmatprep.subr.mxu0 0.0
    %524 = vmatpush1.msra.mxu0 0.0
    %525 = vmatprep.subr.mxu0 0.0
    %526 = vmatpush1.msra.mxu0 0.0
    %527 = vmatprep.subr.mxu0 0.0
    %528 = vmatpush1.msra.mxu0 0.0
    %529 = vmatprep.subr.mxu0 0.0
    %530 = vmatpush1.msra.mxu0 0.0
    %531 = vmatprep.subr.mxu0 0.0
    %532 = vmatpush1.msra.mxu0 0.0
    %533 = vmatprep.subr.mxu0 0.0
    %534 = vmatpush1.msra.mxu0 0.0
    %535 = vmatprep.subr.mxu0 0.0
    %536 = vmatpush1.msra.mxu0 0.0
    %537 = vmatprep.mubr.f32.mxu0 0.0
    %v538 = vand.u32 %v52, 4294901760
    %539 = vmatmul.mubr.f32.gmra.mrb[0].mxu0 %v538
    %v540 = vpop.f32.mrb[0].mxu0
    %v541 = vadd.f32 %v463, %v540
    %v542 = vpop.f32.mrb[0].mxu0
    %543 = vmatprep.mubr.f32.mxu0 0.0
    %v544 = vand.u32 %v55, 4294901760
    %545 = vmatmul.mubr.f32.gmra.mrb[0].mxu0 %v544
    %v546 = vpop.f32.mrb[0].mxu0
    %v547 = vadd.f32 %v469, %v546
    %v548 = vpop.f32.mrb[0].mxu0
    %549 = vdwg.mxu0
    %v550 = vtanh.pop %v541
    %v551 = vtanh.pop %v547
    %v552 = vld [vmem:[#allocation2] sm:$0xff]
    %v553 = vld [vmem:[#allocation2 + $0x8] sm:$0xff]
    %v554 = vld [vmem:[#allocation2 + $0x10] sm:$0xff]
    %v555 = vld [vmem:[#allocation2 + $0x18] sm:$0xff]
    %v556 = vld [vmem:[#allocation2 + $0x20] sm:$0xff]
    %v557 = vld [vmem:[#allocation2 + $0x28] sm:$0xff]
    %v558 = vld [vmem:[#allocation2 + $0x30] sm:$0xff]
    %v559 = vld [vmem:[#allocation2 + $0x38] sm:$0xff]
    %vm560 = vcmask 523264
    %v562 = vsel %vm560, %v550, 0
    %v565 = vsel %vm560, %v551, 0
    %567 = vmatprep.subr.mxu0 0.0
    %v568 = vand.u32 %v552, 4294901760
    %569 = vmatpush1.msra.mxu0 %v568
    %570 = vmatprep.subr.mxu0 0.0
    %v571 = vand.u32 %v553, 4294901760
    %572 = vmatpush1.msra.mxu0 %v571
    %573 = vmatprep.subr.mxu0 0.0
    %v574 = vand.u32 %v554, 4294901760
    %575 = vmatpush1.msra.mxu0 %v574
    %576 = vmatprep.subr.mxu0 0.0
    %v577 = vand.u32 %v555, 4294901760
    %578 = vmatpush1.msra.mxu0 %v577
    %579 = vmatprep.subr.mxu0 0.0
    %v580 = vand.u32 %v556, 4294901760
    %581 = vmatpush1.msra.mxu0 %v580
    %582 = vmatprep.subr.mxu0 0.0
    %v583 = vand.u32 %v557, 4294901760
    %584 = vmatpush1.msra.mxu0 %v583
    %585 = vmatprep.subr.mxu0 0.0
    %v586 = vand.u32 %v558, 4294901760
    %587 = vmatpush1.msra.mxu0 %v586
    %588 = vmatprep.subr.mxu0 0.0
    %v589 = vand.u32 %v559, 4294901760
    %590 = vmatpush1.msra.mxu0 %v589
    %591 = vmatprep.subr.mxu0 0.0
    %592 = vmatpush1.msra.mxu0 0.0
    %593 = vmatprep.subr.mxu0 0.0
    %594 = vmatpush1.msra.mxu0 0.0
    %595 = vmatprep.subr.mxu0 0.0
    %596 = vmatpush1.msra.mxu0 0.0
    %597 = vmatprep.subr.mxu0 0.0
    %598 = vmatpush1.msra.mxu0 0.0
    %599 = vmatprep.subr.mxu0 0.0
    %600 = vmatpush1.msra.mxu0 0.0
    %601 = vmatprep.subr.mxu0 0.0
    %602 = vmatpush1.msra.mxu0 0.0
    %603 = vmatprep.subr.mxu0 0.0
    %604 = vmatpush1.msra.mxu0 0.0
    %605 = vmatprep.subr.mxu0 0.0
    %606 = vmatpush1.msra.mxu0 0.0
    %607 = vmatprep.subr.mxu0 0.0
    %608 = vmatpush1.msra.mxu0 0.0
    %609 = vmatprep.subr.mxu0 0.0
    %610 = vmatpush1.msra.mxu0 0.0
    %611 = vmatprep.subr.mxu0 0.0
    %612 = vmatpush1.msra.mxu0 0.0
    %613 = vmatprep.subr.mxu0 0.0
    %614 = vmatpush1.msra.mxu0 0.0
    %615 = vmatprep.subr.mxu0 0.0
    %616 = vmatpush1.msra.mxu0 0.0
    %617 = vmatprep.subr.mxu0 0.0
    %618 = vmatpush1.msra.mxu0 0.0
    %619 = vmatprep.subr.mxu0 0.0
    %620 = vmatpush1.msra.mxu0 0.0
    %621 = vmatprep.subr.mxu0 0.0
    %622 = vmatpush1.msra.mxu0 0.0
    %623 = vmatprep.subr.mxu0 0.0
    %624 = vmatpush1.msra.mxu0 0.0
    %625 = vmatprep.subr.mxu0 0.0
    %626 = vmatpush1.msra.mxu0 0.0
    %627 = vmatprep.subr.mxu0 0.0
    %628 = vmatpush1.msra.mxu0 0.0
    %629 = vmatprep.subr.mxu0 0.0
    %630 = vmatpush1.msra.mxu0 0.0
    %631 = vmatprep.subr.mxu0 0.0
    %632 = vmatpush1.msra.mxu0 0.0
    %633 = vmatprep.subr.mxu0 0.0
    %634 = vmatpush1.msra.mxu0 0.0
    %635 = vmatprep.subr.mxu0 0.0
    %636 = vmatpush1.msra.mxu0 0.0
    %637 = vmatprep.subr.mxu0 0.0
    %638 = vmatpush1.msra.mxu0 0.0
    %639 = vmatprep.mubr.f32.mxu0 0.0
    %v640 = vand.u32 %v562, 4294901760
    %v641 = vsub.f32 %v562, %v640
    %v642 = vand.u32 %v641, 4294901760
    %v643 = vsub.f32 %v641, %v642
    %v644 = vand.u32 %v643, 4294901760
    %645 = vmatmul.mubr.f32.gmra.mrb[0].mxu0 %v644
    %v646 = vpop.f32.mrb[0].mxu0
    %v647 = vadd.f32 0.0, %v646
    %v648 = vpop.f32.mrb[0].mxu0
    %649 = vmatprep.mubr.f32.mxu0 0.0
    %v650 = vand.u32 %v565, 4294901760
    %v651 = vsub.f32 %v565, %v650
    %v652 = vand.u32 %v651, 4294901760
    %v653 = vsub.f32 %v651, %v652
    %v654 = vand.u32 %v653, 4294901760
    %655 = vmatmul.mubr.f32.gmra.mrb[0].mxu0 %v654
    %v656 = vpop.f32.mrb[0].mxu0
    %v657 = vadd.f32 0.0, %v656
    %v658 = vpop.f32.mrb[0].mxu0
    %659 = vdwg.mxu0
    %660 = vmatprep.subr.mxu0 0.0
    %v661 = vand.u32 %v552, 4294901760
    %v662 = vsub.f32 %v552, %v661
    %v663 = vand.u32 %v662, 4294901760
    %v664 = vsub.f32 %v662, %v663
    %v665 = vand.u32 %v664, 4294901760
    %666 = vmatpush1.msra.mxu0 %v665
    %667 = vmatprep.subr.mxu0 0.0
    %v668 = vand.u32 %v553, 4294901760
    %v669 = vsub.f32 %v553, %v668
    %v670 = vand.u32 %v669, 4294901760
    %v671 = vsub.f32 %v669, %v670
    %v672 = vand.u32 %v671, 4294901760
    %673 = vmatpush1.msra.mxu0 %v672
    %674 = vmatprep.subr.mxu0 0.0
    %v675 = vand.u32 %v554, 4294901760
    %v676 = vsub.f32 %v554, %v675
    %v677 = vand.u32 %v676, 4294901760
    %v678 = vsub.f32 %v676, %v677
    %v679 = vand.u32 %v678, 4294901760
    %680 = vmatpush1.msra.mxu0 %v679
    %681 = vmatprep.subr.mxu0 0.0
    %v682 = vand.u32 %v555, 4294901760
    %v683 = vsub.f32 %v555, %v682
    %v684 = vand.u32 %v683, 4294901760
    %v685 = vsub.f32 %v683, %v684
    %v686 = vand.u32 %v685, 4294901760
    %687 = vmatpush1.msra.mxu0 %v686
    %688 = vmatprep.subr.mxu0 0.0
    %v689 = vand.u32 %v556, 4294901760
    %v690 = vsub.f32 %v556, %v689
    %v691 = vand.u32 %v690, 4294901760
    %v692 = vsub.f32 %v690, %v691
    %v693 = vand.u32 %v692, 4294901760
    %694 = vmatpush1.msra.mxu0 %v693
    %695 = vmatprep.subr.mxu0 0.0
    %v696 = vand.u32 %v557, 4294901760
    %v697 = vsub.f32 %v557, %v696
    %v698 = vand.u32 %v697, 4294901760
    %v699 = vsub.f32 %v697, %v698
    %v700 = vand.u32 %v699, 4294901760
    %701 = vmatpush1.msra.mxu0 %v700
    %702 = vmatprep.subr.mxu0 0.0
    %v703 = vand.u32 %v558, 4294901760
    %v704 = vsub.f32 %v558, %v703
    %v705 = vand.u32 %v704, 4294901760
    %v706 = vsub.f32 %v704, %v705
    %v707 = vand.u32 %v706, 4294901760
    %708 = vmatpush1.msra.mxu0 %v707
    %709 = vmatprep.subr.mxu0 0.0
    %v710 = vand.u32 %v559, 4294901760
    %v711 = vsub.f32 %v559, %v710
    %v712 = vand.u32 %v711, 4294901760
    %v713 = vsub.f32 %v711, %v712
    %v714 = vand.u32 %v713, 4294901760
    %715 = vmatpush1.msra.mxu0 %v714
    %716 = vmatprep.subr.mxu0 0.0
    %717 = vmatpush1.msra.mxu0 0.0
    %718 = vmatprep.subr.mxu0 0.0
    %719 = vmatpush1.msra.mxu0 0.0
    %720 = vmatprep.subr.mxu0 0.0
    %721 = vmatpush1.msra.mxu0 0.0
    %722 = vmatprep.subr.mxu0 0.0
    %723 = vmatpush1.msra.mxu0 0.0
    %724 = vmatprep.subr.mxu0 0.0
    %725 = vmatpush1.msra.mxu0 0.0
    %726 = vmatprep.subr.mxu0 0.0
    %727 = vmatpush1.msra.mxu0 0.0
    %728 = vmatprep.subr.mxu0 0.0
    %729 = vmatpush1.msra.mxu0 0.0
    %730 = vmatprep.subr.mxu0 0.0
    %731 = vmatpush1.msra.mxu0 0.0
    %732 = vmatprep.subr.mxu0 0.0
    %733 = vmatpush1.msra.mxu0 0.0
    %734 = vmatprep.subr.mxu0 0.0
    %735 = vmatpush1.msra.mxu0 0.0
    %736 = vmatprep.subr.mxu0 0.0
    %737 = vmatpush1.msra.mxu0 0.0
    %738 = vmatprep.subr.mxu0 0.0
    %739 = vmatpush1.msra.mxu0 0.0
    %740 = vmatprep.subr.mxu0 0.0
    %741 = vmatpush1.msra.mxu0 0.0
    %742 = vmatprep.subr.mxu0 0.0
    %743 = vmatpush1.msra.mxu0 0.0
    %744 = vmatprep.subr.mxu0 0.0
    %745 = vmatpush1.msra.mxu0 0.0
    %746 = vmatprep.subr.mxu0 0.0
    %747 = vmatpush1.msra.mxu0 0.0
    %748 = vmatprep.subr.mxu0 0.0
    %749 = vmatpush1.msra.mxu0 0.0
    %750 = vmatprep.subr.mxu0 0.0
    %751 = vmatpush1.msra.mxu0 0.0
    %752 = vmatprep.subr.mxu0 0.0
    %753 = vmatpush1.msra.mxu0 0.0
    %754 = vmatprep.subr.mxu0 0.0
    %755 = vmatpush1.msra.mxu0 0.0
    %756 = vmatprep.subr.mxu0 0.0
    %757 = vmatpush1.msra.mxu0 0.0
    %758 = vmatprep.subr.mxu0 0.0
    %759 = vmatpush1.msra.mxu0 0.0
    %760 = vmatprep.subr.mxu0 0.0
    %761 = vmatpush1.msra.mxu0 0.0
    %762 = vmatprep.subr.mxu0 0.0
    %763 = vmatpush1.msra.mxu0 0.0
    %764 = vmatprep.mubr.f32.mxu0 0.0
    %v765 = vand.u32 %v562, 4294901760
    %766 = vmatmul.mubr.f32.gmra.mrb[0].mxu0 %v765
    %v767 = vpop.f32.mrb[0].mxu0
    %v768 = vadd.f32 %v647, %v767
    %v769 = vpop.f32.mrb[0].mxu0
    %770 = vmatprep.mubr.f32.mxu0 0.0
    %v771 = vand.u32 %v565, 4294901760
    %772 = vmatmul.mubr.f32.gmra.mrb[0].mxu0 %v771
    %v773 = vpop.f32.mrb[0].mxu0
    %v774 = vadd.f32 %v657, %v773
    %v775 = vpop.f32.mrb[0].mxu0
    %776 = vdwg.mxu0
    %777 = vmatprep.subr.mxu0 0.0
    %v778 = vand.u32 %v552, 4294901760
    %v779 = vsub.f32 %v552, %v778
    %780 = vmatpush1.msra.mxu0 %v779
    %781 = vmatprep.subr.mxu0 0.0
    %v782 = vand.u32 %v553, 4294901760
    %v783 = vsub.f32 %v553, %v782
    %784 = vmatpush1.msra.mxu0 %v783
    %785 = vmatprep.subr.mxu0 0.0
    %v786 = vand.u32 %v554, 4294901760
    %v787 = vsub.f32 %v554, %v786
    %788 = vmatpush1.msra.mxu0 %v787
    %789 = vmatprep.subr.mxu0 0.0
    %v790 = vand.u32 %v555, 4294901760
    %v791 = vsub.f32 %v555, %v790
    %792 = vmatpush1.msra.mxu0 %v791
    %793 = vmatprep.subr.mxu0 0.0
    %v794 = vand.u32 %v556, 4294901760
    %v795 = vsub.f32 %v556, %v794
    %796 = vmatpush1.msra.mxu0 %v795
    %797 = vmatprep.subr.mxu0 0.0
    %v798 = vand.u32 %v557, 4294901760
    %v799 = vsub.f32 %v557, %v798
    %800 = vmatpush1.msra.mxu0 %v799
    %801 = vmatprep.subr.mxu0 0.0
    %v802 = vand.u32 %v558, 4294901760
    %v803 = vsub.f32 %v558, %v802
    %804 = vmatpush1.msra.mxu0 %v803
    %805 = vmatprep.subr.mxu0 0.0
    %v806 = vand.u32 %v559, 4294901760
    %v807 = vsub.f32 %v559, %v806
    %808 = vmatpush1.msra.mxu0 %v807
    %809 = vmatprep.subr.mxu0 0.0
    %810 = vmatpush1.msra.mxu0 0.0
    %811 = vmatprep.subr.mxu0 0.0
    %812 = vmatpush1.msra.mxu0 0.0
    %813 = vmatprep.subr.mxu0 0.0
    %814 = vmatpush1.msra.mxu0 0.0
    %815 = vmatprep.subr.mxu0 0.0
    %816 = vmatpush1.msra.mxu0 0.0
    %817 = vmatprep.subr.mxu0 0.0
    %818 = vmatpush1.msra.mxu0 0.0
    %819 = vmatprep.subr.mxu0 0.0
    %820 = vmatpush1.msra.mxu0 0.0
    %821 = vmatprep.subr.mxu0 0.0
    %822 = vmatpush1.msra.mxu0 0.0
    %823 = vmatprep.subr.mxu0 0.0
    %824 = vmatpush1.msra.mxu0 0.0
    %825 = vmatprep.subr.mxu0 0.0
    %826 = vmatpush1.msra.mxu0 0.0
    %827 = vmatprep.subr.mxu0 0.0
    %828 = vmatpush1.msra.mxu0 0.0
    %829 = vmatprep.subr.mxu0 0.0
    %830 = vmatpush1.msra.mxu0 0.0
    %831 = vmatprep.subr.mxu0 0.0
    %832 = vmatpush1.msra.mxu0 0.0
    %833 = vmatprep.subr.mxu0 0.0
    %834 = vmatpush1.msra.mxu0 0.0
    %835 = vmatprep.subr.mxu0 0.0
    %836 = vmatpush1.msra.mxu0 0.0
    %837 = vmatprep.subr.mxu0 0.0
    %838 = vmatpush1.msra.mxu0 0.0
    %839 = vmatprep.subr.mxu0 0.0
    %840 = vmatpush1.msra.mxu0 0.0
    %841 = vmatprep.subr.mxu0 0.0
    %842 = vmatpush1.msra.mxu0 0.0
    %843 = vmatprep.subr.mxu0 0.0
    %844 = vmatpush1.msra.mxu0 0.0
    %845 = vmatprep.subr.mxu0 0.0
    %846 = vmatpush1.msra.mxu0 0.0
    %847 = vmatprep.subr.mxu0 0.0
    %848 = vmatpush1.msra.mxu0 0.0
    %849 = vmatprep.subr.mxu0 0.0
    %850 = vmatpush1.msra.mxu0 0.0
    %851 = vmatprep.subr.mxu0 0.0
    %852 = vmatpush1.msra.mxu0 0.0
    %853 = vmatprep.subr.mxu0 0.0
    %854 = vmatpush1.msra.mxu0 0.0
    %855 = vmatprep.subr.mxu0 0.0
    %856 = vmatpush1.msra.mxu0 0.0
    %857 = vmatprep.mubr.f32.mxu0 0.0
    %v858 = vand.u32 %v562, 4294901760
    %v859 = vsub.f32 %v562, %v858
    %860 = vmatmul.mubr.f32.gmra.mrb[0].mxu0 %v859
    %v861 = vpop.f32.mrb[0].mxu0
    %v862 = vadd.f32 %v768, %v861
    %v863 = vpop.f32.mrb[0].mxu0
    %864 = vmatprep.mubr.f32.mxu0 0.0
    %v865 = vand.u32 %v565, 4294901760
    %v866 = vsub.f32 %v565, %v865
    %867 = vmatmul.mubr.f32.gmra.mrb[0].mxu0 %v866
    %v868 = vpop.f32.mrb[0].mxu0
    %v869 = vadd.f32 %v774, %v868
    %v870 = vpop.f32.mrb[0].mxu0
    %871 = vdwg.mxu0
    %872 = vmatprep.subr.mxu0 0.0
    %v873 = vand.u32 %v552, 4294901760
    %874 = vmatpush1.msra.mxu0 %v873
    %875 = vmatprep.subr.mxu0 0.0
    %v876 = vand.u32 %v553, 4294901760
    %877 = vmatpush1.msra.mxu0 %v876
    %878 = vmatprep.subr.mxu0 0.0
    %v879 = vand.u32 %v554, 4294901760
    %880 = vmatpush1.msra.mxu0 %v879
    %881 = vmatprep.subr.mxu0 0.0
    %v882 = vand.u32 %v555, 4294901760
    %883 = vmatpush1.msra.mxu0 %v882
    %884 = vmatprep.subr.mxu0 0.0
    %v885 = vand.u32 %v556, 4294901760
    %886 = vmatpush1.msra.mxu0 %v885
    %887 = vmatprep.subr.mxu0 0.0
    %v888 = vand.u32 %v557, 4294901760
    %889 = vmatpush1.msra.mxu0 %v888
    %890 = vmatprep.subr.mxu0 0.0
    %v891 = vand.u32 %v558, 4294901760
    %892 = vmatpush1.msra.mxu0 %v891
    %893 = vmatprep.subr.mxu0 0.0
    %v894 = vand.u32 %v559, 4294901760
    %895 = vmatpush1.msra.mxu0 %v894
    %896 = vmatprep.subr.mxu0 0.0
    %897 = vmatpush1.msra.mxu0 0.0
    %898 = vmatprep.subr.mxu0 0.0
    %899 = vmatpush1.msra.mxu0 0.0
    %900 = vmatprep.subr.mxu0 0.0
    %901 = vmatpush1.msra.mxu0 0.0
    %902 = vmatprep.subr.mxu0 0.0
    %903 = vmatpush1.msra.mxu0 0.0
    %904 = vmatprep.subr.mxu0 0.0
    %905 = vmatpush1.msra.mxu0 0.0
    %906 = vmatprep.subr.mxu0 0.0
    %907 = vmatpush1.msra.mxu0 0.0
    %908 = vmatprep.subr.mxu0 0.0
    %909 = vmatpush1.msra.mxu0 0.0
    %910 = vmatprep.subr.mxu0 0.0
    %911 = vmatpush1.msra.mxu0 0.0
    %912 = vmatprep.subr.mxu0 0.0
    %913 = vmatpush1.msra.mxu0 0.0
    %914 = vmatprep.subr.mxu0 0.0
    %915 = vmatpush1.msra.mxu0 0.0
    %916 = vmatprep.subr.mxu0 0.0
    %917 = vmatpush1.msra.mxu0 0.0
    %918 = vmatprep.subr.mxu0 0.0
    %919 = vmatpush1.msra.mxu0 0.0
    %920 = vmatprep.subr.mxu0 0.0
    %921 = vmatpush1.msra.mxu0 0.0
    %922 = vmatprep.subr.mxu0 0.0
    %923 = vmatpush1.msra.mxu0 0.0
    %924 = vmatprep.subr.mxu0 0.0
    %925 = vmatpush1.msra.mxu0 0.0
    %926 = vmatprep.subr.mxu0 0.0
    %927 = vmatpush1.msra.mxu0 0.0
    %928 = vmatprep.subr.mxu0 0.0
    %929 = vmatpush1.msra.mxu0 0.0
    %930 = vmatprep.subr.mxu0 0.0
    %931 = vmatpush1.msra.mxu0 0.0
    %932 = vmatprep.subr.mxu0 0.0
    %933 = vmatpush1.msra.mxu0 0.0
    %934 = vmatprep.subr.mxu0 0.0
    %935 = vmatpush1.msra.mxu0 0.0
    %936 = vmatprep.subr.mxu0 0.0
    %937 = vmatpush1.msra.mxu0 0.0
    %938 = vmatprep.subr.mxu0 0.0
    %939 = vmatpush1.msra.mxu0 0.0
    %940 = vmatprep.subr.mxu0 0.0
    %941 = vmatpush1.msra.mxu0 0.0
    %942 = vmatprep.subr.mxu0 0.0
    %943 = vmatpush1.msra.mxu0 0.0
    %944 = vmatprep.mubr.f32.mxu0 0.0
    %v945 = vand.u32 %v562, 4294901760
    %v946 = vsub.f32 %v562, %v945
    %v947 = vand.u32 %v946, 4294901760
    %948 = vmatmul.mubr.f32.gmra.mrb[0].mxu0 %v947
    %v949 = vpop.f32.mrb[0].mxu0
    %v950 = vadd.f32 %v862, %v949
    %v951 = vpop.f32.mrb[0].mxu0
    %952 = vmatprep.mubr.f32.mxu0 0.0
    %v953 = vand.u32 %v565, 4294901760
    %v954 = vsub.f32 %v565, %v953
    %v955 = vand.u32 %v954, 4294901760
    %956 = vmatmul.mubr.f32.gmra.mrb[0].mxu0 %v955
    %v957 = vpop.f32.mrb[0].mxu0
    %v958 = vadd.f32 %v869, %v957
    %v959 = vpop.f32.mrb[0].mxu0
    %960 = vdwg.mxu0
    %961 = vmatprep.subr.mxu0 0.0
    %v962 = vand.u32 %v552, 4294901760
    %v963 = vsub.f32 %v552, %v962
    %v964 = vand.u32 %v963, 4294901760
    %965 = vmatpush1.msra.mxu0 %v964
    %966 = vmatprep.subr.mxu0 0.0
    %v967 = vand.u32 %v553, 4294901760
    %v968 = vsub.f32 %v553, %v967
    %v969 = vand.u32 %v968, 4294901760
    %970 = vmatpush1.msra.mxu0 %v969
    %971 = vmatprep.subr.mxu0 0.0
    %v972 = vand.u32 %v554, 4294901760
    %v973 = vsub.f32 %v554, %v972
    %v974 = vand.u32 %v973, 4294901760
    %975 = vmatpush1.msra.mxu0 %v974
    %976 = vmatprep.subr.mxu0 0.0
    %v977 = vand.u32 %v555, 4294901760
    %v978 = vsub.f32 %v555, %v977
    %v979 = vand.u32 %v978, 4294901760
    %980 = vmatpush1.msra.mxu0 %v979
    %981 = vmatprep.subr.mxu0 0.0
    %v982 = vand.u32 %v556, 4294901760
    %v983 = vsub.f32 %v556, %v982
    %v984 = vand.u32 %v983, 4294901760
    %985 = vmatpush1.msra.mxu0 %v984
    %986 = vmatprep.subr.mxu0 0.0
    %v987 = vand.u32 %v557, 4294901760
    %v988 = vsub.f32 %v557, %v987
    %v989 = vand.u32 %v988, 4294901760
    %990 = vmatpush1.msra.mxu0 %v989
    %991 = vmatprep.subr.mxu0 0.0
    %v992 = vand.u32 %v558, 4294901760
    %v993 = vsub.f32 %v558, %v992
    %v994 = vand.u32 %v993, 4294901760
    %995 = vmatpush1.msra.mxu0 %v994
    %996 = vmatprep.subr.mxu0 0.0
    %v997 = vand.u32 %v559, 4294901760
    %v998 = vsub.f32 %v559, %v997
    %v999 = vand.u32 %v998, 4294901760
    %1000 = vmatpush1.msra.mxu0 %v999
    %1001 = vmatprep.subr.mxu0 0.0
    %1002 = vmatpush1.msra.mxu0 0.0
    %1003 = vmatprep.subr.mxu0 0.0
    %1004 = vmatpush1.msra.mxu0 0.0
    %1005 = vmatprep.subr.mxu0 0.0
    %1006 = vmatpush1.msra.mxu0 0.0
    %1007 = vmatprep.subr.mxu0 0.0
    %1008 = vmatpush1.msra.mxu0 0.0
    %1009 = vmatprep.subr.mxu0 0.0
    %1010 = vmatpush1.msra.mxu0 0.0
    %1011 = vmatprep.subr.mxu0 0.0
    %1012 = vmatpush1.msra.mxu0 0.0
    %1013 = vmatprep.subr.mxu0 0.0
    %1014 = vmatpush1.msra.mxu0 0.0
    %1015 = vmatprep.subr.mxu0 0.0
    %1016 = vmatpush1.msra.mxu0 0.0
    %1017 = vmatprep.subr.mxu0 0.0
    %1018 = vmatpush1.msra.mxu0 0.0
    %1019 = vmatprep.subr.mxu0 0.0
    %1020 = vmatpush1.msra.mxu0 0.0
    %1021 = vmatprep.subr.mxu0 0.0
    %1022 = vmatpush1.msra.mxu0 0.0
    %1023 = vmatprep.subr.mxu0 0.0
    %1024 = vmatpush1.msra.mxu0 0.0
    %1025 = vmatprep.subr.mxu0 0.0
    %1026 = vmatpush1.msra.mxu0 0.0
    %1027 = vmatprep.subr.mxu0 0.0
    %1028 = vmatpush1.msra.mxu0 0.0
    %1029 = vmatprep.subr.mxu0 0.0
    %1030 = vmatpush1.msra.mxu0 0.0
    %1031 = vmatprep.subr.mxu0 0.0
    %1032 = vmatpush1.msra.mxu0 0.0
    %1033 = vmatprep.subr.mxu0 0.0
    %1034 = vmatpush1.msra.mxu0 0.0
    %1035 = vmatprep.subr.mxu0 0.0
    %1036 = vmatpush1.msra.mxu0 0.0
    %1037 = vmatprep.subr.mxu0 0.0
    %1038 = vmatpush1.msra.mxu0 0.0
    %1039 = vmatprep.subr.mxu0 0.0
    %1040 = vmatpush1.msra.mxu0 0.0
    %1041 = vmatprep.subr.mxu0 0.0
    %1042 = vmatpush1.msra.mxu0 0.0
    %1043 = vmatprep.subr.mxu0 0.0
    %1044 = vmatpush1.msra.mxu0 0.0
    %1045 = vmatprep.subr.mxu0 0.0
    %1046 = vmatpush1.msra.mxu0 0.0
    %1047 = vmatprep.subr.mxu0 0.0
    %1048 = vmatpush1.msra.mxu0 0.0
    %1049 = vmatprep.mubr.f32.mxu0 0.0
    %v1050 = vand.u32 %v562, 4294901760
    %1051 = vmatmul.mubr.f32.gmra.mrb[0].mxu0 %v1050
    %v1052 = vpop.f32.mrb[0].mxu0
    %v1053 = vadd.f32 %v950, %v1052
    %v1054 = vpop.f32.mrb[0].mxu0
    %1055 = vmatprep.mubr.f32.mxu0 0.0
    %v1056 = vand.u32 %v565, 4294901760
    %1057 = vmatmul.mubr.f32.gmra.mrb[0].mxu0 %v1056
    %v1058 = vpop.f32.mrb[0].mxu0
    %v1059 = vadd.f32 %v958, %v1058
    %v1060 = vpop.f32.mrb[0].mxu0
    %1061 = vdwg.mxu0
    %1062 = vmatprep.subr.mxu0 0.0
    %v1063 = vand.u32 %v552, 4294901760
    %1064 = vmatpush1.msra.mxu0 %v1063
    %1065 = vmatprep.subr.mxu0 0.0
    %v1066 = vand.u32 %v553, 4294901760
    %1067 = vmatpush1.msra.mxu0 %v1066
    %1068 = vmatprep.subr.mxu0 0.0
    %v1069 = vand.u32 %v554, 4294901760
    %1070 = vmatpush1.msra.mxu0 %v1069
    %1071 = vmatprep.subr.mxu0 0.0
    %v1072 = vand.u32 %v555, 4294901760
    %1073 = vmatpush1.msra.mxu0 %v1072
    %1074 = vmatprep.subr.mxu0 0.0
    %v1075 = vand.u32 %v556, 4294901760
    %1076 = vmatpush1.msra.mxu0 %v1075
    %1077 = vmatprep.subr.mxu0 0.0
    %v1078 = vand.u32 %v557, 4294901760
    %1079 = vmatpush1.msra.mxu0 %v1078
    %1080 = vmatprep.subr.mxu0 0.0
    %v1081 = vand.u32 %v558, 4294901760
    %1082 = vmatpush1.msra.mxu0 %v1081
    %1083 = vmatprep.subr.mxu0 0.0
    %v1084 = vand.u32 %v559, 4294901760
    %1085 = vmatpush1.msra.mxu0 %v1084
    %1086 = vmatprep.subr.mxu0 0.0
    %1087 = vmatpush1.msra.mxu0 0.0
    %1088 = vmatprep.subr.mxu0 0.0
    %1089 = vmatpush1.msra.mxu0 0.0
    %1090 = vmatprep.subr.mxu0 0.0
    %1091 = vmatpush1.msra.mxu0 0.0
    %1092 = vmatprep.subr.mxu0 0.0
    %1093 = vmatpush1.msra.mxu0 0.0
    %1094 = vmatprep.subr.mxu0 0.0
    %1095 = vmatpush1.msra.mxu0 0.0
    %1096 = vmatprep.subr.mxu0 0.0
    %1097 = vmatpush1.msra.mxu0 0.0
    %1098 = vmatprep.subr.mxu0 0.0
    %1099 = vmatpush1.msra.mxu0 0.0
    %1100 = vmatprep.subr.mxu0 0.0
    %1101 = vmatpush1.msra.mxu0 0.0
    %1102 = vmatprep.subr.mxu0 0.0
    %1103 = vmatpush1.msra.mxu0 0.0
    %1104 = vmatprep.subr.mxu0 0.0
    %1105 = vmatpush1.msra.mxu0 0.0
    %1106 = vmatprep.subr.mxu0 0.0
    %1107 = vmatpush1.msra.mxu0 0.0
    %1108 = vmatprep.subr.mxu0 0.0
    %1109 = vmatpush1.msra.mxu0 0.0
    %1110 = vmatprep.subr.mxu0 0.0
    %1111 = vmatpush1.msra.mxu0 0.0
    %1112 = vmatprep.subr.mxu0 0.0
    %1113 = vmatpush1.msra.mxu0 0.0
    %1114 = vmatprep.subr.mxu0 0.0
    %1115 = vmatpush1.msra.mxu0 0.0
    %1116 = vmatprep.subr.mxu0 0.0
    %1117 = vmatpush1.msra.mxu0 0.0
    %1118 = vmatprep.subr.mxu0 0.0
    %1119 = vmatpush1.msra.mxu0 0.0
    %1120 = vmatprep.subr.mxu0 0.0
    %1121 = vmatpush1.msra.mxu0 0.0
    %1122 = vmatprep.subr.mxu0 0.0
    %1123 = vmatpush1.msra.mxu0 0.0
    %1124 = vmatprep.subr.mxu0 0.0
    %1125 = vmatpush1.msra.mxu0 0.0
    %1126 = vmatprep.subr.mxu0 0.0
    %1127 = vmatpush1.msra.mxu0 0.0
    %1128 = vmatprep.subr.mxu0 0.0
    %1129 = vmatpush1.msra.mxu0 0.0
    %1130 = vmatprep.subr.mxu0 0.0
    %1131 = vmatpush1.msra.mxu0 0.0
    %1132 = vmatprep.subr.mxu0 0.0
    %1133 = vmatpush1.msra.mxu0 0.0
    %1134 = vmatprep.mubr.f32.mxu0 0.0
    %v1135 = vand.u32 %v562, 4294901760
    %1136 = vmatmul.mubr.f32.gmra.mrb[0].mxu0 %v1135
    %v1137 = vpop.f32.mrb[0].mxu0
    %v1138 = vadd.f32 %v1053, %v1137
    %v1139 = vpop.f32.mrb[0].mxu0
    %1140 = vmatprep.mubr.f32.mxu0 0.0
    %v1141 = vand.u32 %v565, 4294901760
    %1142 = vmatmul.mubr.f32.gmra.mrb[0].mxu0 %v1141
    %v1143 = vpop.f32.mrb[0].mxu0
    %v1144 = vadd.f32 %v1059, %v1143
    %v1145 = vpop.f32.mrb[0].mxu0
    %1146 = vdwg.mxu0
    %v1147 = vld [vmem:[%s5] sm:$0xf]
    %v1149 = vsel %vm50, %v40, 0
    %v1152 = vsel %vm50, %v41, 0
    %v1155 = vsel %vm57, %v1147, 0
    %1157 = vmatprep.subr.mxu0 0.0
    %v1158 = vand.u32 %v1155, 4294901760
    %1159 = vmatpush1.msra.mxu0 %v1158
    %1160 = vmatprep.subr.mxu0 0.0
    %1161 = vmatpush1.msra.mxu0 0.0
    %1162 = vmatprep.subr.mxu0 0.0
    %1163 = vmatpush1.msra.mxu0 0.0
    %1164 = vmatprep.subr.mxu0 0.0
    %1165 = vmatpush1.msra.mxu0 0.0
    %1166 = vmatprep.subr.mxu0 0.0
    %1167 = vmatpush1.msra.mxu0 0.0
    %1168 = vmatprep.subr.mxu0 0.0
    %1169 = vmatpush1.msra.mxu0 0.0
    %1170 = vmatprep.subr.mxu0 0.0
    %1171 = vmatpush1.msra.mxu0 0.0
    %1172 = vmatprep.subr.mxu0 0.0
    %1173 = vmatpush1.msra.mxu0 0.0
    %1174 = vmatprep.subr.mxu0 0.0
    %1175 = vmatpush1.msra.mxu0 0.0
    %1176 = vmatprep.subr.mxu0 0.0
    %1177 = vmatpush1.msra.mxu0 0.0
    %1178 = vmatprep.subr.mxu0 0.0
    %1179 = vmatpush1.msra.mxu0 0.0
    %1180 = vmatprep.subr.mxu0 0.0
    %1181 = vmatpush1.msra.mxu0 0.0
    %1182 = vmatprep.subr.mxu0 0.0
    %1183 = vmatpush1.msra.mxu0 0.0
    %1184 = vmatprep.subr.mxu0 0.0
    %1185 = vmatpush1.msra.mxu0 0.0
    %1186 = vmatprep.subr.mxu0 0.0
    %1187 = vmatpush1.msra.mxu0 0.0
    %1188 = vmatprep.subr.mxu0 0.0
    %1189 = vmatpush1.msra.mxu0 0.0
    %1190 = vmatprep.subr.mxu0 0.0
    %1191 = vmatpush1.msra.mxu0 0.0
    %1192 = vmatprep.subr.mxu0 0.0
    %1193 = vmatpush1.msra.mxu0 0.0
    %1194 = vmatprep.subr.mxu0 0.0
    %1195 = vmatpush1.msra.mxu0 0.0
    %1196 = vmatprep.subr.mxu0 0.0
    %1197 = vmatpush1.msra.mxu0 0.0
    %1198 = vmatprep.subr.mxu0 0.0
    %1199 = vmatpush1.msra.mxu0 0.0
    %1200 = vmatprep.subr.mxu0 0.0
    %1201 = vmatpush1.msra.mxu0 0.0
    %1202 = vmatprep.subr.mxu0 0.0
    %1203 = vmatpush1.msra.mxu0 0.0
    %1204 = vmatprep.subr.mxu0 0.0
    %1205 = vmatpush1.msra.mxu0 0.0
    %1206 = vmatprep.subr.mxu0 0.0
    %1207 = vmatpush1.msra.mxu0 0.0
    %1208 = vmatprep.subr.mxu0 0.0
    %1209 = vmatpush1.msra.mxu0 0.0
    %1210 = vmatprep.subr.mxu0 0.0
    %1211 = vmatpush1.msra.mxu0 0.0
    %1212 = vmatprep.subr.mxu0 0.0
    %1213 = vmatpush1.msra.mxu0 0.0
    %1214 = vmatprep.subr.mxu0 0.0
    %1215 = vmatpush1.msra.mxu0 0.0
    %1216 = vmatprep.subr.mxu0 0.0
    %1217 = vmatpush1.msra.mxu0 0.0
    %1218 = vmatprep.subr.mxu0 0.0
    %1219 = vmatpush1.msra.mxu0 0.0
    %1220 = vmatprep.subr.mxu0 0.0
    %1221 = vmatpush1.msra.mxu0 0.0
    %1222 = vmatprep.mubr.f32.mxu0 0.0
    %v1223 = vand.u32 %v1149, 4294901760
    %v1224 = vsub.f32 %v1149, %v1223
    %v1225 = vand.u32 %v1224, 4294901760
    %v1226 = vsub.f32 %v1224, %v1225
    %v1227 = vand.u32 %v1226, 4294901760
    %1228 = vmatmul.mubr.f32.gmra.mrb[0].mxu0 %v1227
    %v1229 = vpop.f32.mrb[0].mxu0
    %v1230 = vadd.f32 0.0, %v1229
    %v1231 = vpop.f32.mrb[0].mxu0
    %1232 = vmatprep.mubr.f32.mxu0 0.0
    %v1233 = vand.u32 %v1152, 4294901760
    %v1234 = vsub.f32 %v1152, %v1233
    %v1235 = vand.u32 %v1234, 4294901760
    %v1236 = vsub.f32 %v1234, %v1235
    %v1237 = vand.u32 %v1236, 4294901760
    %1238 = vmatmul.mubr.f32.gmra.mrb[0].mxu0 %v1237
    %v1239 = vpop.f32.mrb[0].mxu0
    %v1240 = vadd.f32 0.0, %v1239
    %v1241 = vpop.f32.mrb[0].mxu0
    %1242 = vdwg.mxu0
    %1243 = vmatprep.subr.mxu0 0.0
    %v1244 = vand.u32 %v1155, 4294901760
    %v1245 = vsub.f32 %v1155, %v1244
    %v1246 = vand.u32 %v1245, 4294901760
    %v1247 = vsub.f32 %v1245, %v1246
    %v1248 = vand.u32 %v1247, 4294901760
    %1249 = vmatpush1.msra.mxu0 %v1248
    %1250 = vmatprep.subr.mxu0 0.0
    %1251 = vmatpush1.msra.mxu0 0.0
    %1252 = vmatprep.subr.mxu0 0.0
    %1253 = vmatpush1.msra.mxu0 0.0
    %1254 = vmatprep.subr.mxu0 0.0
    %1255 = vmatpush1.msra.mxu0 0.0
    %1256 = vmatprep.subr.mxu0 0.0
    %1257 = vmatpush1.msra.mxu0 0.0
    %1258 = vmatprep.subr.mxu0 0.0
    %1259 = vmatpush1.msra.mxu0 0.0
    %1260 = vmatprep.subr.mxu0 0.0
    %1261 = vmatpush1.msra.mxu0 0.0
    %1262 = vmatprep.subr.mxu0 0.0
    %1263 = vmatpush1.msra.mxu0 0.0
    %1264 = vmatprep.subr.mxu0 0.0
    %1265 = vmatpush1.msra.mxu0 0.0
    %1266 = vmatprep.subr.mxu0 0.0
    %1267 = vmatpush1.msra.mxu0 0.0
    %1268 = vmatprep.subr.mxu0 0.0
    %1269 = vmatpush1.msra.mxu0 0.0
    %1270 = vmatprep.subr.mxu0 0.0
    %1271 = vmatpush1.msra.mxu0 0.0
    %1272 = vmatprep.subr.mxu0 0.0
    %1273 = vmatpush1.msra.mxu0 0.0
    %1274 = vmatprep.subr.mxu0 0.0
    %1275 = vmatpush1.msra.mxu0 0.0
    %1276 = vmatprep.subr.mxu0 0.0
    %1277 = vmatpush1.msra.mxu0 0.0
    %1278 = vmatprep.subr.mxu0 0.0
    %1279 = vmatpush1.msra.mxu0 0.0
    %1280 = vmatprep.subr.mxu0 0.0
    %1281 = vmatpush1.msra.mxu0 0.0
    %1282 = vmatprep.subr.mxu0 0.0
    %1283 = vmatpush1.msra.mxu0 0.0
    %1284 = vmatprep.subr.mxu0 0.0
    %1285 = vmatpush1.msra.mxu0 0.0
    %1286 = vmatprep.subr.mxu0 0.0
    %1287 = vmatpush1.msra.mxu0 0.0
    %1288 = vmatprep.subr.mxu0 0.0
    %1289 = vmatpush1.msra.mxu0 0.0
    %1290 = vmatprep.subr.mxu0 0.0
    %1291 = vmatpush1.msra.mxu0 0.0
    %1292 = vmatprep.subr.mxu0 0.0
    %1293 = vmatpush1.msra.mxu0 0.0
    %1294 = vmatprep.subr.mxu0 0.0
    %1295 = vmatpush1.msra.mxu0 0.0
    %1296 = vmatprep.subr.mxu0 0.0
    %1297 = vmatpush1.msra.mxu0 0.0
    %1298 = vmatprep.subr.mxu0 0.0
    %1299 = vmatpush1.msra.mxu0 0.0
    %1300 = vmatprep.subr.mxu0 0.0
    %1301 = vmatpush1.msra.mxu0 0.0
    %1302 = vmatprep.subr.mxu0 0.0
    %1303 = vmatpush1.msra.mxu0 0.0
    %1304 = vmatprep.subr.mxu0 0.0
    %1305 = vmatpush1.msra.mxu0 0.0
    %1306 = vmatprep.subr.mxu0 0.0
    %1307 = vmatpush1.msra.mxu0 0.0
    %1308 = vmatprep.subr.mxu0 0.0
    %1309 = vmatpush1.msra.mxu0 0.0
    %1310 = vmatprep.subr.mxu0 0.0
    %1311 = vmatpush1.msra.mxu0 0.0
    %1312 = vmatprep.mubr.f32.mxu0 0.0
    %v1313 = vand.u32 %v1149, 4294901760
    %1314 = vmatmul.mubr.f32.gmra.mrb[0].mxu0 %v1313
    %v1315 = vpop.f32.mrb[0].mxu0
    %v1316 = vadd.f32 %v1230, %v1315
    %v1317 = vpop.f32.mrb[0].mxu0
    %1318 = vmatprep.mubr.f32.mxu0 0.0
    %v1319 = vand.u32 %v1152, 4294901760
    %1320 = vmatmul.mubr.f32.gmra.mrb[0].mxu0 %v1319
    %v1321 = vpop.f32.mrb[0].mxu0
    %v1322 = vadd.f32 %v1240, %v1321
    %v1323 = vpop.f32.mrb[0].mxu0
    %1324 = vdwg.mxu0
    %1325 = vmatprep.subr.mxu0 0.0
    %v1326 = vand.u32 %v1155, 4294901760
    %v1327 = vsub.f32 %v1155, %v1326
    %1328 = vmatpush1.msra.mxu0 %v1327
    %1329 = vmatprep.subr.mxu0 0.0
    %1330 = vmatpush1.msra.mxu0 0.0
    %1331 = vmatprep.subr.mxu0 0.0
    %1332 = vmatpush1.msra.mxu0 0.0
    %1333 = vmatprep.subr.mxu0 0.0
    %1334 = vmatpush1.msra.mxu0 0.0
    %1335 = vmatprep.subr.mxu0 0.0
    %1336 = vmatpush1.msra.mxu0 0.0
    %1337 = vmatprep.subr.mxu0 0.0
    %1338 = vmatpush1.msra.mxu0 0.0
    %1339 = vmatprep.subr.mxu0 0.0
    %1340 = vmatpush1.msra.mxu0 0.0
    %1341 = vmatprep.subr.mxu0 0.0
    %1342 = vmatpush1.msra.mxu0 0.0
    %1343 = vmatprep.subr.mxu0 0.0
    %1344 = vmatpush1.msra.mxu0 0.0
    %1345 = vmatprep.subr.mxu0 0.0
    %1346 = vmatpush1.msra.mxu0 0.0
    %1347 = vmatprep.subr.mxu0 0.0
    %1348 = vmatpush1.msra.mxu0 0.0
    %1349 = vmatprep.subr.mxu0 0.0
    %1350 = vmatpush1.msra.mxu0 0.0
    %1351 = vmatprep.subr.mxu0 0.0
    %1352 = vmatpush1.msra.mxu0 0.0
    %1353 = vmatprep.subr.mxu0 0.0
    %1354 = vmatpush1.msra.mxu0 0.0
    %1355 = vmatprep.subr.mxu0 0.0
    %1356 = vmatpush1.msra.mxu0 0.0
    %1357 = vmatprep.subr.mxu0 0.0
    %1358 = vmatpush1.msra.mxu0 0.0
    %1359 = vmatprep.subr.mxu0 0.0
    %1360 = vmatpush1.msra.mxu0 0.0
    %1361 = vmatprep.subr.mxu0 0.0
    %1362 = vmatpush1.msra.mxu0 0.0
    %1363 = vmatprep.subr.mxu0 0.0
    %1364 = vmatpush1.msra.mxu0 0.0
    %1365 = vmatprep.subr.mxu0 0.0
    %1366 = vmatpush1.msra.mxu0 0.0
    %1367 = vmatprep.subr.mxu0 0.0
    %1368 = vmatpush1.msra.mxu0 0.0
    %1369 = vmatprep.subr.mxu0 0.0
    %1370 = vmatpush1.msra.mxu0 0.0
    %1371 = vmatprep.subr.mxu0 0.0
    %1372 = vmatpush1.msra.mxu0 0.0
    %1373 = vmatprep.subr.mxu0 0.0
    %1374 = vmatpush1.msra.mxu0 0.0
    %1375 = vmatprep.subr.mxu0 0.0
    %1376 = vmatpush1.msra.mxu0 0.0
    %1377 = vmatprep.subr.mxu0 0.0
    %1378 = vmatpush1.msra.mxu0 0.0
    %1379 = vmatprep.subr.mxu0 0.0
    %1380 = vmatpush1.msra.mxu0 0.0
    %1381 = vmatprep.subr.mxu0 0.0
    %1382 = vmatpush1.msra.mxu0 0.0
    %1383 = vmatprep.subr.mxu0 0.0
    %1384 = vmatpush1.msra.mxu0 0.0
    %1385 = vmatprep.subr.mxu0 0.0
    %1386 = vmatpush1.msra.mxu0 0.0
    %1387 = vmatprep.subr.mxu0 0.0
    %1388 = vmatpush1.msra.mxu0 0.0
    %1389 = vmatprep.subr.mxu0 0.0
    %1390 = vmatpush1.msra.mxu0 0.0
    %1391 = vmatprep.mubr.f32.mxu0 0.0
    %v1392 = vand.u32 %v1149, 4294901760
    %v1393 = vsub.f32 %v1149, %v1392
    %1394 = vmatmul.mubr.f32.gmra.mrb[0].mxu0 %v1393
    %v1395 = vpop.f32.mrb[0].mxu0
    %v1396 = vadd.f32 %v1316, %v1395
    %v1397 = vpop.f32.mrb[0].mxu0
    %1398 = vmatprep.mubr.f32.mxu0 0.0
    %v1399 = vand.u32 %v1152, 4294901760
    %v1400 = vsub.f32 %v1152, %v1399
    %1401 = vmatmul.mubr.f32.gmra.mrb[0].mxu0 %v1400
    %v1402 = vpop.f32.mrb[0].mxu0
    %v1403 = vadd.f32 %v1322, %v1402
    %v1404 = vpop.f32.mrb[0].mxu0
    %1405 = vdwg.mxu0
    %1406 = vmatprep.subr.mxu0 0.0
    %v1407 = vand.u32 %v1155, 4294901760
    %1408 = vmatpush1.msra.mxu0 %v1407
    %1409 = vmatprep.subr.mxu0 0.0
    %1410 = vmatpush1.msra.mxu0 0.0
    %1411 = vmatprep.subr.mxu0 0.0
    %1412 = vmatpush1.msra.mxu0 0.0
    %1413 = vmatprep.subr.mxu0 0.0
    %1414 = vmatpush1.msra.mxu0 0.0
    %1415 = vmatprep.subr.mxu0 0.0
    %1416 = vmatpush1.msra.mxu0 0.0
    %1417 = vmatprep.subr.mxu0 0.0
    %1418 = vmatpush1.msra.mxu0 0.0
    %1419 = vmatprep.subr.mxu0 0.0
    %1420 = vmatpush1.msra.mxu0 0.0
    %1421 = vmatprep.subr.mxu0 0.0
    %1422 = vmatpush1.msra.mxu0 0.0
    %1423 = vmatprep.subr.mxu0 0.0
    %1424 = vmatpush1.msra.mxu0 0.0
    %1425 = vmatprep.subr.mxu0 0.0
    %1426 = vmatpush1.msra.mxu0 0.0
    %1427 = vmatprep.subr.mxu0 0.0
    %1428 = vmatpush1.msra.mxu0 0.0
    %1429 = vmatprep.subr.mxu0 0.0
    %1430 = vmatpush1.msra.mxu0 0.0
    %1431 = vmatprep.subr.mxu0 0.0
    %1432 = vmatpush1.msra.mxu0 0.0
    %1433 = vmatprep.subr.mxu0 0.0
    %1434 = vmatpush1.msra.mxu0 0.0
    %1435 = vmatprep.subr.mxu0 0.0
    %1436 = vmatpush1.msra.mxu0 0.0
    %1437 = vmatprep.subr.mxu0 0.0
    %1438 = vmatpush1.msra.mxu0 0.0
    %1439 = vmatprep.subr.mxu0 0.0
    %1440 = vmatpush1.msra.mxu0 0.0
    %1441 = vmatprep.subr.mxu0 0.0
    %1442 = vmatpush1.msra.mxu0 0.0
    %1443 = vmatprep.subr.mxu0 0.0
    %1444 = vmatpush1.msra.mxu0 0.0
    %1445 = vmatprep.subr.mxu0 0.0
    %1446 = vmatpush1.msra.mxu0 0.0
    %1447 = vmatprep.subr.mxu0 0.0
    %1448 = vmatpush1.msra.mxu0 0.0
    %1449 = vmatprep.subr.mxu0 0.0
    %1450 = vmatpush1.msra.mxu0 0.0
    %1451 = vmatprep.subr.mxu0 0.0
    %1452 = vmatpush1.msra.mxu0 0.0
    %1453 = vmatprep.subr.mxu0 0.0
    %1454 = vmatpush1.msra.mxu0 0.0
    %1455 = vmatprep.subr.mxu0 0.0
    %1456 = vmatpush1.msra.mxu0 0.0
    %1457 = vmatprep.subr.mxu0 0.0
    %1458 = vmatpush1.msra.mxu0 0.0
    %1459 = vmatprep.subr.mxu0 0.0
    %1460 = vmatpush1.msra.mxu0 0.0
    %1461 = vmatprep.subr.mxu0 0.0
    %1462 = vmatpush1.msra.mxu0 0.0
    %1463 = vmatprep.subr.mxu0 0.0
    %1464 = vmatpush1.msra.mxu0 0.0
    %1465 = vmatprep.subr.mxu0 0.0
    %1466 = vmatpush1.msra.mxu0 0.0
    %1467 = vmatprep.subr.mxu0 0.0
    %1468 = vmatpush1.msra.mxu0 0.0
    %1469 = vmatprep.subr.mxu0 0.0
    %1470 = vmatpush1.msra.mxu0 0.0
    %1471 = vmatprep.mubr.f32.mxu0 0.0
    %v1472 = vand.u32 %v1149, 4294901760
    %v1473 = vsub.f32 %v1149, %v1472
    %v1474 = vand.u32 %v1473, 4294901760
    %1475 = vmatmul.mubr.f32.gmra.mrb[0].mxu0 %v1474
    %v1476 = vpop.f32.mrb[0].mxu0
    %v1477 = vadd.f32 %v1396, %v1476
    %v1478 = vpop.f32.mrb[0].mxu0
    %1479 = vmatprep.mubr.f32.mxu0 0.0
    %v1480 = vand.u32 %v1152, 4294901760
    %v1481 = vsub.f32 %v1152, %v1480
    %v1482 = vand.u32 %v1481, 4294901760
    %1483 = vmatmul.mubr.f32.gmra.mrb[0].mxu0 %v1482
    %v1484 = vpop.f32.mrb[0].mxu0
    %v1485 = vadd.f32 %v1403, %v1484
    %v1486 = vpop.f32.mrb[0].mxu0
    %1487 = vdwg.mxu0
    %1488 = vmatprep.subr.mxu0 0.0
    %v1489 = vand.u32 %v1155, 4294901760
    %v1490 = vsub.f32 %v1155, %v1489
    %v1491 = vand.u32 %v1490, 4294901760
    %1492 = vmatpush1.msra.mxu0 %v1491
    %1493 = vmatprep.subr.mxu0 0.0
    %1494 = vmatpush1.msra.mxu0 0.0
    %1495 = vmatprep.subr.mxu0 0.0
    %1496 = vmatpush1.msra.mxu0 0.0
    %1497 = vmatprep.subr.mxu0 0.0
    %1498 = vmatpush1.msra.mxu0 0.0
    %1499 = vmatprep.subr.mxu0 0.0
    %1500 = vmatpush1.msra.mxu0 0.0
    %1501 = vmatprep.subr.mxu0 0.0
    %1502 = vmatpush1.msra.mxu0 0.0
    %1503 = vmatprep.subr.mxu0 0.0
    %1504 = vmatpush1.msra.mxu0 0.0
    %1505 = vmatprep.subr.mxu0 0.0
    %1506 = vmatpush1.msra.mxu0 0.0
    %1507 = vmatprep.subr.mxu0 0.0
    %1508 = vmatpush1.msra.mxu0 0.0
    %1509 = vmatprep.subr.mxu0 0.0
    %1510 = vmatpush1.msra.mxu0 0.0
    %1511 = vmatprep.subr.mxu0 0.0
    %1512 = vmatpush1.msra.mxu0 0.0
    %1513 = vmatprep.subr.mxu0 0.0
    %1514 = vmatpush1.msra.mxu0 0.0
    %1515 = vmatprep.subr.mxu0 0.0
    %1516 = vmatpush1.msra.mxu0 0.0
    %1517 = vmatprep.subr.mxu0 0.0
    %1518 = vmatpush1.msra.mxu0 0.0
    %1519 = vmatprep.subr.mxu0 0.0
    %1520 = vmatpush1.msra.mxu0 0.0
    %1521 = vmatprep.subr.mxu0 0.0
    %1522 = vmatpush1.msra.mxu0 0.0
    %1523 = vmatprep.subr.mxu0 0.0
    %1524 = vmatpush1.msra.mxu0 0.0
    %1525 = vmatprep.subr.mxu0 0.0
    %1526 = vmatpush1.msra.mxu0 0.0
    %1527 = vmatprep.subr.mxu0 0.0
    %1528 = vmatpush1.msra.mxu0 0.0
    %1529 = vmatprep.subr.mxu0 0.0
    %1530 = vmatpush1.msra.mxu0 0.0
    %1531 = vmatprep.subr.mxu0 0.0
    %1532 = vmatpush1.msra.mxu0 0.0
    %1533 = vmatprep.subr.mxu0 0.0
    %1534 = vmatpush1.msra.mxu0 0.0
    %1535 = vmatprep.subr.mxu0 0.0
    %1536 = vmatpush1.msra.mxu0 0.0
    %1537 = vmatprep.subr.mxu0 0.0
    %1538 = vmatpush1.msra.mxu0 0.0
    %1539 = vmatprep.subr.mxu0 0.0
    %1540 = vmatpush1.msra.mxu0 0.0
    %1541 = vmatprep.subr.mxu0 0.0
    %1542 = vmatpush1.msra.mxu0 0.0
    %1543 = vmatprep.subr.mxu0 0.0
    %1544 = vmatpush1.msra.mxu0 0.0
    %1545 = vmatprep.subr.mxu0 0.0
    %1546 = vmatpush1.msra.mxu0 0.0
    %1547 = vmatprep.subr.mxu0 0.0
    %1548 = vmatpush1.msra.mxu0 0.0
    %1549 = vmatprep.subr.mxu0 0.0
    %1550 = vmatpush1.msra.mxu0 0.0
    %1551 = vmatprep.subr.mxu0 0.0
    %1552 = vmatpush1.msra.mxu0 0.0
    %1553 = vmatprep.subr.mxu0 0.0
    %1554 = vmatpush1.msra.mxu0 0.0
    %1555 = vmatprep.mubr.f32.mxu0 0.0
    %v1556 = vand.u32 %v1149, 4294901760
    %1557 = vmatmul.mubr.f32.gmra.mrb[0].mxu0 %v1556
    %v1558 = vpop.f32.mrb[0].mxu0
    %v1559 = vadd.f32 %v1477, %v1558
    %v1560 = vpop.f32.mrb[0].mxu0
    %1561 = vmatprep.mubr.f32.mxu0 0.0
    %v1562 = vand.u32 %v1152, 4294901760
    %1563 = vmatmul.mubr.f32.gmra.mrb[0].mxu0 %v1562
    %v1564 = vpop.f32.mrb[0].mxu0
    %v1565 = vadd.f32 %v1485, %v1564
    %v1566 = vpop.f32.mrb[0].mxu0
    %1567 = vdwg.mxu0
    %1568 = vmatprep.subr.mxu0 0.0
    %v1569 = vand.u32 %v1155, 4294901760
    %1570 = vmatpush1.msra.mxu0 %v1569
    %1571 = vmatprep.subr.mxu0 0.0
    %1572 = vmatpush1.msra.mxu0 0.0
    %1573 = vmatprep.subr.mxu0 0.0
    %1574 = vmatpush1.msra.mxu0 0.0
    %1575 = vmatprep.subr.mxu0 0.0
    %1576 = vmatpush1.msra.mxu0 0.0
    %1577 = vmatprep.subr.mxu0 0.0
    %1578 = vmatpush1.msra.mxu0 0.0
    %1579 = vmatprep.subr.mxu0 0.0
    %1580 = vmatpush1.msra.mxu0 0.0
    %1581 = vmatprep.subr.mxu0 0.0
    %1582 = vmatpush1.msra.mxu0 0.0
    %1583 = vmatprep.subr.mxu0 0.0
    %1584 = vmatpush1.msra.mxu0 0.0
    %1585 = vmatprep.subr.mxu0 0.0
    %1586 = vmatpush1.msra.mxu0 0.0
    %1587 = vmatprep.subr.mxu0 0.0
    %1588 = vmatpush1.msra.mxu0 0.0
    %1589 = vmatprep.subr.mxu0 0.0
    %1590 = vmatpush1.msra.mxu0 0.0
    %1591 = vmatprep.subr.mxu0 0.0
    %1592 = vmatpush1.msra.mxu0 0.0
    %1593 = vmatprep.subr.mxu0 0.0
    %1594 = vmatpush1.msra.mxu0 0.0
    %1595 = vmatprep.subr.mxu0 0.0
    %1596 = vmatpush1.msra.mxu0 0.0
    %1597 = vmatprep.subr.mxu0 0.0
    %1598 = vmatpush1.msra.mxu0 0.0
    %1599 = vmatprep.subr.mxu0 0.0
    %1600 = vmatpush1.msra.mxu0 0.0
    %1601 = vmatprep.subr.mxu0 0.0
    %1602 = vmatpush1.msra.mxu0 0.0
    %1603 = vmatprep.subr.mxu0 0.0
    %1604 = vmatpush1.msra.mxu0 0.0
    %1605 = vmatprep.subr.mxu0 0.0
    %1606 = vmatpush1.msra.mxu0 0.0
    %1607 = vmatprep.subr.mxu0 0.0
    %1608 = vmatpush1.msra.mxu0 0.0
    %1609 = vmatprep.subr.mxu0 0.0
    %1610 = vmatpush1.msra.mxu0 0.0
    %1611 = vmatprep.subr.mxu0 0.0
    %1612 = vmatpush1.msra.mxu0 0.0
    %1613 = vmatprep.subr.mxu0 0.0
    %1614 = vmatpush1.msra.mxu0 0.0
    %1615 = vmatprep.subr.mxu0 0.0
    %1616 = vmatpush1.msra.mxu0 0.0
    %1617 = vmatprep.subr.mxu0 0.0
    %1618 = vmatpush1.msra.mxu0 0.0
    %1619 = vmatprep.subr.mxu0 0.0
    %1620 = vmatpush1.msra.mxu0 0.0
    %1621 = vmatprep.subr.mxu0 0.0
    %1622 = vmatpush1.msra.mxu0 0.0
    %1623 = vmatprep.subr.mxu0 0.0
    %1624 = vmatpush1.msra.mxu0 0.0
    %1625 = vmatprep.subr.mxu0 0.0
    %1626 = vmatpush1.msra.mxu0 0.0
    %1627 = vmatprep.subr.mxu0 0.0
    %1628 = vmatpush1.msra.mxu0 0.0
    %1629 = vmatprep.subr.mxu0 0.0
    %1630 = vmatpush1.msra.mxu0 0.0
    %1631 = vmatprep.subr.mxu0 0.0
    %1632 = vmatpush1.msra.mxu0 0.0
    %1633 = vmatprep.mubr.f32.mxu0 0.0
    %v1634 = vand.u32 %v1149, 4294901760
    %1635 = vmatmul.mubr.f32.gmra.mrb[0].mxu0 %v1634
    %v1636 = vpop.f32.mrb[0].mxu0
    %v1637 = vadd.f32 %v1559, %v1636
    %v1638 = vpop.f32.mrb[0].mxu0
    %1639 = vmatprep.mubr.f32.mxu0 0.0
    %v1640 = vand.u32 %v1152, 4294901760
    %1641 = vmatmul.mubr.f32.gmra.mrb[0].mxu0 %v1640
    %v1642 = vpop.f32.mrb[0].mxu0
    %v1643 = vadd.f32 %v1565, %v1642
    %v1644 = vpop.f32.mrb[0].mxu0
    %1645 = vdwg.mxu0
    %v1646 = vmul.f32 %v1138, %v1637
    %v1647 = vmul.f32 %v1144, %v1643
    %1648 = vst [vmem:[#allocation5] sm:$0xff] %v1646
    %1649 = vst [vmem:[#allocation5 + $0x8] sm:$0xff] %v1647
    // Predicated region
    $region30: #{tpu_custom_call.1} parent=1 // pred_check
      _
    $region31: #{tpu_custom_call.1} parent=1 // pred_check_branch
      %1651 = sbr.rel (0) target = $region33
    $region32: #{tpu_custom_call.1} parent=1 // pred_region
      %s1653 = ssub.s32 256, 256
      %1654 = vsyncadd [#allocation4], %s1653
      %s1655 = sshll.u32 [#allocation5], 4
      %s1656 = int_to_ptr.vmem [resolvable:$true] %s1655
      %1661 = dma.vmem_to_hbm [thread:$0]  %s1656, 256, %s6, [#allocation4], 128, 128, 8
    $region33: #{tpu_custom_call.1} parent=1 // pred_fallthru
      _
    // Predicated region
    $region34: #{tpu_custom_call.1} parent=1 // pred_check
      _
    $region35: #{tpu_custom_call.1} parent=1 // pred_check_branch
      %1663 = sbr.rel (0) target = $region37
    $region36: #{tpu_custom_call.1} parent=1 // pred_region
      %1664 = dma.done [#allocation4], 256
    $region37: #{tpu_custom_call.1} parent=1 // pred_fallthru
      _
    %1665 = vsyncpa [#allocation3], 1
    %1666 = vsyncpa [#allocation4], 1

</llo_original>
